<compile_context>
chip_gen: v7x
topology: tpu7x:2x2x1
jax: 0.10.0
libtpu: 0.0.40
codegen_flags: <defaults>
</compile_context>

<pallas_src>
import math

import jax
import jax.numpy as jnp
from jax import lax
from jax.experimental import pallas as pl
from jax.experimental.pallas import tpu as pltpu

LANE = 128
SUBLANE = 8


def _cdiv(a, b):
    return -(-a // b)


def _round_up(a, b):
    return _cdiv(a, b) * b


def _chip_config():
    """Return (max_block_rows, n_cores) tuned per TPU generation."""
    try:
        kind = jax.devices()[0].device_kind.lower()
    except Exception:
        return 2048, 1
    if "v7" in kind:
        return 4096, 2          # 2 TCs / chip, 3.2 TB/s: big blocks + core split
    if "v6" in kind:
        return 4096, 1          # 32 MiB scoped-VMEM default, 1 TC
    if "v5p" in kind:
        return 2048, 2          # megacore (2 TCs behind one device)
    if "v5" in kind:
        return 2048, 1          # v5e: 16 MiB scoped-VMEM default
    if "v4" in kind:
        return 2048, 2          # megacore
    return 2048, 1


# ---------------------------------------------------------------------------
# Pallas kernel: elementwise KL of a (rows, 128) pair, reduced to a scalar.
# Contract: every element inside the array bounds contributes its KL term
# (callers pad with the prior itself, which contributes exactly 0); rows past
# the array end (non-dividing last block) are zero-masked inside the kernel.
# ---------------------------------------------------------------------------
def _kl_sum_2d(mu2, ls2, prior_mu, prior_log_sigma):
    rows = int(mu2.shape[0])
    assert mu2.shape == ls2.shape and int(mu2.shape[1]) == LANE

    pmu = float(prior_mu)
    pls = float(prior_log_sigma)
    c0 = pls - 0.5                      # prior_log_sigma - 0.5
    c1 = 0.5 * math.exp(-2.0 * pls)     # 1 / (2 * exp(prior_log_sigma)^2)

    sub = SUBLANE
    if (jnp.dtype(mu2.dtype).itemsize < 4) or (jnp.dtype(ls2.dtype).itemsize < 4):
        sub = 2 * SUBLANE               # 16-bit tiles are (16, 128)

    max_rows, cores_cfg = _chip_config()
    block_rows = min(_round_up(max_rows, sub), rows)
    n_blocks = _cdiv(rows, block_rows)

    # Split the sweep across TensorCores on multi-TC chips, but only if the
    # block count divides evenly (never generate a fully out-of-bounds block).
    n_core = 1
    if cores_cfg > 1 and n_blocks > 1:
        if n_blocks % cores_cfg != 0:
            tgt = _round_up(n_blocks, cores_cfg)
            block_rows = _round_up(_cdiv(rows, tgt), sub)
            n_blocks = _cdiv(rows, block_rows)
        if n_blocks % cores_cfg == 0:
            n_core = cores_cfg
    blocks_per_core = n_blocks // n_core

    # Only a non-dividing final block needs (row-level) masking.
    needs_mask = (n_blocks * block_rows != rows)

    def kernel(mu_ref, ls_ref, out_ref):
        c = pl.program_id(0)            # TensorCore partial ("parallel")
        i = pl.program_id(1)            # reduction sweep ("arbitrary")

        @pl.when(i == 0)
        def _():
            out_ref[...] = jnp.zeros_like(out_ref)

        mu = mu_ref[...].astype(jnp.float32)
        ls = ls_ref[...].astype(jnp.float32)
        sq = mu * mu if pmu == 0.0 else (mu - pmu) * (mu - pmu)
        # kl = c0 - ls + (exp(2*ls) + (mu - pmu)^2) * c1   (one exp, no divide)
        kl = (c0 - ls) + (jnp.exp(2.0 * ls) + sq) * c1

        if needs_mask:
            # Zero out rows past the end of the array (last, partial block).
            blk = c * blocks_per_core + i
            rem = rows - blk * block_rows
            row = lax.broadcasted_iota(jnp.int32, (block_rows, LANE), 0)
            kl = jnp.where(row < rem, kl, 0.0)

        # Fold the block into one (8,128) vreg of partial sums (VPU adds hide
        # under the DMA of the next block).
        out_ref[...] += kl.reshape(block_rows // SUBLANE, SUBLANE, LANE).sum(axis=0)

    in_spec = pl.BlockSpec((block_rows, LANE),
                           lambda c, i: (c * blocks_per_core + i, 0))
    out_spec = pl.BlockSpec((SUBLANE, LANE), lambda c, i: (c, 0))

    partials = pl.pallas_call(
        kernel,
        out_shape=jax.ShapeDtypeStruct((n_core * SUBLANE, LANE), jnp.float32),
        grid_spec=pltpu.PrefetchScalarGridSpec(
            num_scalar_prefetch=0,
            grid=(n_core, blocks_per_core),
            in_specs=[in_spec, in_spec],
            out_specs=out_spec,
        ),
        compiler_params=pltpu.CompilerParams(
            dimension_semantics=("parallel", "arbitrary")),
    )(mu2, ls2)

    return jnp.sum(partials)


# ---------------------------------------------------------------------------
# Glue: bucket parameter groups by prior, direct-stream large aligned tensors,
# concat+pad only the small leftovers, apply the reduction.
# ---------------------------------------------------------------------------
def bayesian_kl_loss(param_groups, reduction="mean", last_layer_only=False):
    """param_groups: ordered list of dicts with keys 'mu', 'log_sigma' (arrays)
    and 'prior_mu', 'prior_log_sigma' (python scalars) — one entry per
    weight/bias group of each Bayesian layer in model traversal order."""
    if reduction not in ("mean", "sum"):
        raise ValueError(reduction + " is not valid")
    if len(param_groups) == 0:
        return jnp.zeros((1,), jnp.float32)

    groups = param_groups[-1:] if last_layer_only else param_groups

    # Bucket by (scalar) prior so each kernel has its prior constants baked in.
    # TODO(synk): heterogeneous priors could use a single pallas_call with a
    # per-block (c0, c1) SMEM scalar-prefetch table instead of one call/bucket.
    buckets, order = {}, []
    for g in groups:
        key = (float(g["prior_mu"]), float(g["prior_log_sigma"]))
        if key not in buckets:
            buckets[key] = []
            order.append(key)
        buckets[key].append(g)

    max_rows, _ = _chip_config()
    kl_sum = jnp.float32(0.0)
    n_total = 0
    for pmu, pls in order:
        left_mu, left_ls = [], []
        for g in buckets[(pmu, pls)]:
            mu = jnp.asarray(g["mu"])
            ls = jnp.asarray(g["log_sigma"])
            n = int(mu.size)
            if n == 0:
                continue
            n_total += n
            sub = SUBLANE
            if (jnp.dtype(mu.dtype).itemsize < 4) or (jnp.dtype(ls.dtype).itemsize < 4):
                sub = 2 * SUBLANE
            align = sub * LANE
            if n >= align and n % align == 0:
                # Direct, zero-copy path: contiguous tensor bitcast-reshapes to
                # (n/128, 128) and streams straight out of HBM in its own dtype.
                kl_sum = kl_sum + _kl_sum_2d(mu.reshape(n // LANE, LANE),
                                             ls.reshape(n // LANE, LANE),
                                             pmu, pls)
            else:
                # Small / unaligned leftovers (biases, tails).
                left_mu.append(mu.reshape(-1).astype(jnp.float32))
                left_ls.append(ls.reshape(-1).astype(jnp.float32))

        if left_mu:
            mu_flat = left_mu[0] if len(left_mu) == 1 else jnp.concatenate(left_mu)
            ls_flat = left_ls[0] if len(left_ls) == 1 else jnp.concatenate(left_ls)
            n_left = int(mu_flat.shape[0])
            if n_left > 0:
                rows = _round_up(_cdiv(n_left, LANE), SUBLANE)
                if rows > max_rows:
                    rows = _round_up(rows, max_rows)   # whole blocks only
                pad = rows * LANE - n_left
                # Pad with the prior itself: padded elements contribute 0 KL,
                # so no masking is needed anywhere on this path.
                mu2 = jnp.pad(mu_flat, (0, pad), constant_values=pmu).reshape(rows, LANE)
                ls2 = jnp.pad(ls_flat, (0, pad), constant_values=pls).reshape(rows, LANE)
                kl_sum = kl_sum + _kl_sum_2d(mu2, ls2, pmu, pls)

    if last_layer_only:
        return jnp.reshape(kl_sum, (1,))
    if reduction == "mean":
        return jnp.reshape(kl_sum / jnp.float32(n_total), (1,))
    return jnp.reshape(kl_sum, (1,))


class BKLLoss:
    """JAX/Pallas port of torchbnn BKLLoss. `__call__(model_param_groups)`
    takes the ordered list of Bayesian parameter groups (the 'model')."""

    def __init__(self, reduction="mean", last_layer_only=False):
        self.reduction = reduction
        self.last_layer_only = last_layer_only

    def __call__(self, model_param_groups):
        return bayesian_kl_loss(
            model_param_groups,
            reduction=self.reduction,
            last_layer_only=self.last_layer_only,
        )


# ---------------------------------------------------------------------------
# Deterministic synthetic Bayesian "model": BayesLinear layers (with bias)
# ---------------------------------------------------------------------------
def build_synthetic_bayes_model(key, layer_dims, prior_mu=0.0, prior_sigma=0.1):
    prior_log_sigma = math.log(prior_sigma)
    groups = []
    for (fan_in, fan_out) in layer_dims:
        key, k1, k2, k3, k4 = jax.random.split(key, 5)
        stdv = 1.0 / math.sqrt(fan_in)
        w_mu = jax.random.uniform(k1, (fan_out, fan_in), jnp.float32, -stdv, stdv)
        w_ls = jnp.full((fan_out, fan_in), prior_log_sigma, jnp.float32) \
               + 0.01 * jax.random.normal(k2, (fan_out, fan_in), jnp.float32)
        b_mu = jax.random.uniform(k3, (fan_out,), jnp.float32, -stdv, stdv)
        b_ls = jnp.full((fan_out,), prior_log_sigma, jnp.float32) \
               + 0.01 * jax.random.normal(k4, (fan_out,), jnp.float32)
        # torchbnn traversal order: weight group, then bias group
        groups.append({"mu": w_mu, "log_sigma": w_ls,
                       "prior_mu": prior_mu, "prior_log_sigma": prior_log_sigma})
        groups.append({"mu": b_mu, "log_sigma": b_ls,
                       "prior_mu": prior_mu, "prior_log_sigma": prior_log_sigma})
    return groups


def _reference_kl(groups, reduction="mean", last_layer_only=False):
    # pure-jnp reference (matches torchbnn formula exactly)
    gs = groups[-1:] if last_layer_only else groups
    kl_sum = jnp.float32(0.0)
    n = 0
    for g in gs:
        mu = jnp.asarray(g["mu"], jnp.float32)
        ls = jnp.asarray(g["log_sigma"], jnp.float32)
        pmu = jnp.float32(g["prior_mu"])
        pls = jnp.float32(g["prior_log_sigma"])
        kl = pls - ls + (jnp.exp(ls) ** 2 + (mu - pmu) ** 2) / (2.0 * jnp.exp(pls) ** 2) - 0.5
        kl_sum = kl_sum + jnp.sum(kl)
        n += mu.size
    if last_layer_only:
        return kl_sum
    return kl_sum / n if reduction == "mean" else kl_sum


if __name__ == "__main__":
    key = jax.random.PRNGKey(0)
    # Layers chosen to exercise every code path:
    #  (256, 512): weight 512x256 = 131072 elems  -> direct path (1024 rows)
    #  (100, 30):  weight 30x100  = 3000 elems    -> leftover path (unaligned)
    #  (1024,513): weight 513x1024 = 525312 elems -> direct path, 4104 rows
    #              (non-dividing block count -> exercises the row mask)
    # plus all biases (512 / 30 / 513) on the prior-padded leftover path.
    model = build_synthetic_bayes_model(key, [(256, 512), (100, 30), (1024, 513)])

    loss_mean = BKLLoss(reduction="mean", last_layer_only=False)(model)
    loss_sum = BKLLoss(reduction="sum", last_layer_only=False)(model)
    loss_last = BKLLoss(reduction="mean", last_layer_only=True)(model)
    jax.block_until_ready((loss_mean, loss_sum, loss_last))

    # sanity check against pure-JAX reference
    ref_mean = _reference_kl(model, "mean", False)
    ref_sum = _reference_kl(model, "sum", False)
    ref_last = _reference_kl(model, "mean", True)
    assert jnp.allclose(loss_mean[0], ref_mean, rtol=2e-4, atol=1e-5), (loss_mean[0], ref_mean)
    assert jnp.allclose(loss_sum[0], ref_sum, rtol=2e-4, atol=1e-2), (loss_sum[0], ref_sum)
    assert jnp.allclose(loss_last[0], ref_last, rtol=2e-4, atol=1e-4), (loss_last[0], ref_last)

    print("KERNEL_OK")
</pallas_src>

<mosaic_0001>
module attributes {stable_mosaic.version = 11 : i64} {
  func.func @kernel(%arg0: i32, %arg1: i32, %arg2: memref<1024x128xf32, #tpu.memory_space<vmem>>, %arg3: memref<1024x128xf32, #tpu.memory_space<vmem>>, %arg4: memref<8x128xf32, #tpu.memory_space<vmem>>) attributes {dimension_semantics = [#tpu.dimension_semantics<parallel>, #tpu.dimension_semantics<arbitrary>], iteration_bounds = array<i64: 1, 1>, scalar_prefetch = 0 : i64, scratch_operands = 0 : i64, tpu.core_type = #tpu.core_type<tc>, window_params = [{transform_indices = @transform_0, window_bounds = array<i64: 1024, 128>}, {transform_indices = @transform_1, window_bounds = array<i64: 1024, 128>}, {transform_indices = @transform_2, window_bounds = array<i64: 8, 128>}]} {
    %c0_i32 = arith.constant 0 : i32
    %0 = arith.cmpi eq, %arg1, %c0_i32 : i32
    %1 = arith.extui %0 : i1 to i32
    %c0_i32_0 = arith.constant 0 : i32
    %2 = arith.cmpi ne, %1, %c0_i32_0 : i32
    scf.if %2 {
      %cst_11 = arith.constant 0.000000e+00 : f32
      %20 = vector.broadcast %cst_11 : f32 to vector<8x128xf32>
      %c0_12 = arith.constant 0 : index
      %c0_13 = arith.constant 0 : index
      %21 = vector.load %arg4[%c0_12, %c0_13] : memref<8x128xf32, #tpu.memory_space<vmem>>, vector<8x128xf32>
      tpu.vector_store %arg4[%c0_12, %c0_13], %20 {strides = array<i32>} : memref<8x128xf32, #tpu.memory_space<vmem>>, vector<8x128xf32>,
    } else {
    }
    %c0 = arith.constant 0 : index
    %c0_1 = arith.constant 0 : index
    %3 = vector.load %arg2[%c0, %c0_1] : memref<1024x128xf32, #tpu.memory_space<vmem>>, vector<1024x128xf32>
    %c0_2 = arith.constant 0 : index
    %c0_3 = arith.constant 0 : index
    %4 = vector.load %arg3[%c0_2, %c0_3] : memref<1024x128xf32, #tpu.memory_space<vmem>>, vector<1024x128xf32>
    %5 = arith.mulf %3, %3 : vector<1024x128xf32>
    %cst = arith.constant -2.80258512 : f32
    %6 = vector.broadcast %cst : f32 to vector<1024x128xf32>
    %7 = arith.subf %6, %4 : vector<1024x128xf32>
    %cst_4 = arith.constant 2.000000e+00 : f32
    %8 = vector.broadcast %cst_4 : f32 to vector<1024x128xf32>
    %9 = arith.mulf %8, %4 : vector<1024x128xf32>
    %10 = math.exp %9 : vector<1024x128xf32>
    %11 = arith.addf %10, %5 : vector<1024x128xf32>
    %cst_5 = arith.constant 5.000000e+01 : f32
    %12 = vector.broadcast %cst_5 : f32 to vector<1024x128xf32>
    %13 = arith.mulf %11, %12 : vector<1024x128xf32>
    %14 = arith.addf %7, %13 : vector<1024x128xf32>
    %c0_6 = arith.constant 0 : index
    %c0_7 = arith.constant 0 : index
    %15 = vector.load %arg4[%c0_6, %c0_7] : memref<8x128xf32, #tpu.memory_space<vmem>>, vector<8x128xf32>
    %16 = vector.shape_cast %14 : vector<1024x128xf32> to vector<128x8x128xf32>
    %cst_8 = arith.constant dense<0.000000e+00> : vector<8x128xf32>
    %17 = vector.multi_reduction <add>, %16, %cst_8 [0] : vector<128x8x128xf32> to vector<8x128xf32>
    %18 = arith.addf %15, %17 : vector<8x128xf32>
    %c0_9 = arith.constant 0 : index
    %c0_10 = arith.constant 0 : index
    %19 = vector.load %arg4[%c0_9, %c0_10] : memref<8x128xf32, #tpu.memory_space<vmem>>, vector<8x128xf32>
    tpu.vector_store %arg4[%c0_9, %c0_10], %18 {strides = array<i32>} : memref<8x128xf32, #tpu.memory_space<vmem>>, vector<8x128xf32>,
    return
  }
  func.func @transform_0(%arg0: i32, %arg1: i32) -> (i32, i32) {
    %c1_i32 = arith.constant 1 : i32
    %0 = arith.muli %arg0, %c1_i32 : i32
    %1 = arith.addi %0, %arg1 : i32
    %c0_i32 = arith.constant 0 : i32
    %c0_i32_0 = arith.constant 0 : i32
    return %1, %c0_i32 : i32, i32
  }
  func.func @transform_1(%arg0: i32, %arg1: i32) -> (i32, i32) {
    %c1_i32 = arith.constant 1 : i32
    %0 = arith.muli %arg0, %c1_i32 : i32
    %1 = arith.addi %0, %arg1 : i32
    %c0_i32 = arith.constant 0 : i32
    %c0_i32_0 = arith.constant 0 : i32
    return %1, %c0_i32 : i32, i32
  }
  func.func @transform_2(%arg0: i32, %arg1: i32) -> (i32, i32) {
    %c0_i32 = arith.constant 0 : i32
    %c0_i32_0 = arith.constant 0 : i32
    return %arg0, %c0_i32 : i32, i32
  }
}

</mosaic_0001>

<llo_original>
// kernel: tpu_custom_call.1
$region0: #{tpu_custom_call.1}
  #allocation0 [shape = 'u32[]', space=smem, size = 0x4, offset = 0x4, fixed_abs, tag = 'smem constant byte address 0x4 - core index']
  #allocation1 [shape = 'u32[144,128]{1,0:T(1,128)}', space=vmem, size = 0x12000, scoped, tag = 'internal scratch']
  %s0 = inlined_call_operand.hbm [shape: f32[1024,128], index: 0, kind: input, shape index: {}]
  %s1 = inlined_call_operand.hbm [shape: f32[1024,128], index: 1, kind: input, shape index: {}]
  %s2 = inlined_call_operand.hbm [shape: f32[8,128], index: 2, kind: output, shape index: {}]
  %s3 = sld [smem:[#allocation0]]
  $region30: #{tpu_custom_call.1} parent=0
    _
  %s5 = ssub.s32 1, %s3
  %s6 = scalar_select 0, %s5, %s3
  $region1: #{tpu_custom_call.1} parent=0
    #allocation2 [shape = 'u8[524288]{0}', space=vmem, size = 0x80000, scoped, tag = 'input window, operand 0, single buffered']
    #allocation3 [shape = 's32[1]{0}', space=sflag, size = 0x4, scoped, tag = 'scoped memory for tpu_custom_call.1']
    #allocation4 [shape = 's32[1]{0}', space=sflag, size = 0x4, scoped, tag = 'scoped memory for tpu_custom_call.1']
    #allocation5 [shape = 'u8[524288]{0}', space=vmem, size = 0x80000, scoped, tag = 'input window, operand 1, single buffered']
    #allocation6 [shape = 's32[1]{0}', space=sflag, size = 0x4, scoped, tag = 'scoped memory for tpu_custom_call.1']
    #allocation7 [shape = 'u8[4096]{0}', space=vmem, size = 0x1000, scoped, tag = 'output window, operand 0, single buffered']
    %7 = vsyncpa [#allocation3], 0
    %8 = vsyncpa [#allocation6], 0
    %9 = vsyncpa [#allocation4], 0
    // Predicated region
    $region2: #{tpu_custom_call.1} parent=1 // pred_check
      _
    $region3: #{tpu_custom_call.1} parent=1 // pred_check_branch
      %11 = sbr.rel (0) target = $region5
    $region4: #{tpu_custom_call.1} parent=1 // pred_region
      %s12 = sadd.s32 0, 0
      %s13 = smul.u32 128, %s12
      %s15 = ssub.s32 16384, 16384
      %16 = vsyncadd [#allocation3], %s15
      %s17 = smul.addr %s13, 128
      %s18 = scalar_lea.hbm %s0, %s17
      %s19 = sshll.u32 [#allocation2], 4
      %s20 = int_to_ptr.vmem [resolvable:$true] %s19
      %25 = dma.hbm_to_vmem [thread:$0]  %s18, 16384, %s20, [#allocation3], 128, 128, 8
    $region5: #{tpu_custom_call.1} parent=1 // pred_fallthru
      _
    // Predicated region
    $region6: #{tpu_custom_call.1} parent=1 // pred_check
      _
    $region7: #{tpu_custom_call.1} parent=1 // pred_check_branch
      %27 = sbr.rel (0) target = $region9
    $region8: #{tpu_custom_call.1} parent=1 // pred_region
      %s28 = sadd.s32 0, 0
      %s29 = smul.u32 128, %s28
      %s31 = ssub.s32 16384, 16384
      %32 = vsyncadd [#allocation6], %s31
      %s33 = smul.addr %s29, 128
      %s34 = scalar_lea.hbm %s1, %s33
      %s35 = sshll.u32 [#allocation5], 4
      %s36 = int_to_ptr.vmem [resolvable:$true] %s35
      %41 = dma.hbm_to_vmem [thread:$0]  %s34, 16384, %s36, [#allocation6], 128, 128, 8
    $region9: #{tpu_custom_call.1} parent=1 // pred_fallthru
      _
    // Predicated region
    $region10: #{tpu_custom_call.1} parent=1 // pred_check
      _
    $region11: #{tpu_custom_call.1} parent=1 // pred_check_branch
      %43 = sbr.rel (0) target = $region13
    $region12: #{tpu_custom_call.1} parent=1 // pred_region
      %44 = dma.done [#allocation3], 16384
    $region13: #{tpu_custom_call.1} parent=1 // pred_fallthru
      _
    // Predicated region
    $region14: #{tpu_custom_call.1} parent=1 // pred_check
      _
    $region15: #{tpu_custom_call.1} parent=1 // pred_check_branch
      %46 = sbr.rel (0) target = $region17
    $region16: #{tpu_custom_call.1} parent=1 // pred_region
      %47 = dma.done [#allocation6], 16384
    $region17: #{tpu_custom_call.1} parent=1 // pred_fallthru
      _
    %s48 = sadd.s32 0, 0
    %s49 = smul.u32 128, %s48
    %s50 = sadd.s32 0, 0
    %s51 = smul.u32 128, %s50
    %p52 = scmp.eq.s32.totalorder 0, 0
    // Predicated region
    $region18: #{tpu_custom_call.1} parent=1 // pred_check
      %p53 = pneg %p52
    $region19: #{tpu_custom_call.1} parent=1 // pred_check_branch
      %55 = sbr.rel (%p53) target = $region21
    $region20: #{tpu_custom_call.1} parent=1 // pred_region
      %56 = vst [vmem:[#allocation7] sm:$0xff] 0.0
    $region21: #{tpu_custom_call.1} parent=1 // pred_fallthru
      _
    %v57 = vld [vmem:[#allocation2] sm:$0xff]
    %v58 = vld [vmem:[#allocation2 + $0x8] sm:$0xff]
    %v59 = vld [vmem:[#allocation2 + $0x10] sm:$0xff]
    %v60 = vld [vmem:[#allocation2 + $0x18] sm:$0xff]
    %v61 = vld [vmem:[#allocation2 + $0x20] sm:$0xff]
    %v62 = vld [vmem:[#allocation2 + $0x28] sm:$0xff]
    %v63 = vld [vmem:[#allocation2 + $0x30] sm:$0xff]
    %v64 = vld [vmem:[#allocation2 + $0x38] sm:$0xff]
    %v65 = vld [vmem:[#allocation2 + $0x40] sm:$0xff]
    %v66 = vld [vmem:[#allocation2 + $0x48] sm:$0xff]
    %v67 = vld [vmem:[#allocation2 + $0x50] sm:$0xff]
    %v68 = vld [vmem:[#allocation2 + $0x58] sm:$0xff]
    %v69 = vld [vmem:[#allocation2 + $0x60] sm:$0xff]
    %v70 = vld [vmem:[#allocation2 + $0x68] sm:$0xff]
    %v71 = vld [vmem:[#allocation2 + $0x70] sm:$0xff]
    %v72 = vld [vmem:[#allocation2 + $0x78] sm:$0xff]
    %v73 = vld [vmem:[#allocation2 + $0x80] sm:$0xff]
    %v74 = vld [vmem:[#allocation2 + $0x88] sm:$0xff]
    %v75 = vld [vmem:[#allocation2 + $0x90] sm:$0xff]
    %v76 = vld [vmem:[#allocation2 + $0x98] sm:$0xff]
    %v77 = vld [vmem:[#allocation2 + $0xa0] sm:$0xff]
    %v78 = vld [vmem:[#allocation2 + $0xa8] sm:$0xff]
    %v79 = vld [vmem:[#allocation2 + $0xb0] sm:$0xff]
    %v80 = vld [vmem:[#allocation2 + $0xb8] sm:$0xff]
    %v81 = vld [vmem:[#allocation2 + $0xc0] sm:$0xff]
    %v82 = vld [vmem:[#allocation2 + $0xc8] sm:$0xff]
    %v83 = vld [vmem:[#allocation2 + $0xd0] sm:$0xff]
    %v84 = vld [vmem:[#allocation2 + $0xd8] sm:$0xff]
    %v85 = vld [vmem:[#allocation2 + $0xe0] sm:$0xff]
    %v86 = vld [vmem:[#allocation2 + $0xe8] sm:$0xff]
    %v87 = vld [vmem:[#allocation2 + $0xf0] sm:$0xff]
    %v88 = vld [vmem:[#allocation2 + $0xf8] sm:$0xff]
    %v89 = vld [vmem:[#allocation2 + $0x100] sm:$0xff]
    %v90 = vld [vmem:[#allocation2 + $0x108] sm:$0xff]
    %v91 = vld [vmem:[#allocation2 + $0x110] sm:$0xff]
    %v92 = vld [vmem:[#allocation2 + $0x118] sm:$0xff]
    %v93 = vld [vmem:[#allocation2 + $0x120] sm:$0xff]
    %v94 = vld [vmem:[#allocation2 + $0x128] sm:$0xff]
    %v95 = vld [vmem:[#allocation2 + $0x130] sm:$0xff]
    %v96 = vld [vmem:[#allocation2 + $0x138] sm:$0xff]
    %v97 = vld [vmem:[#allocation2 + $0x140] sm:$0xff]
    %v98 = vld [vmem:[#allocation2 + $0x148] sm:$0xff]
    %v99 = vld [vmem:[#allocation2 + $0x150] sm:$0xff]
    %v100 = vld [vmem:[#allocation2 + $0x158] sm:$0xff]
    %v101 = vld [vmem:[#allocation2 + $0x160] sm:$0xff]
    %v102 = vld [vmem:[#allocation2 + $0x168] sm:$0xff]
    %v103 = vld [vmem:[#allocation2 + $0x170] sm:$0xff]
    %v104 = vld [vmem:[#allocation2 + $0x178] sm:$0xff]
    %v105 = vld [vmem:[#allocation2 + $0x180] sm:$0xff]
    %v106 = vld [vmem:[#allocation2 + $0x188] sm:$0xff]
    %v107 = vld [vmem:[#allocation2 + $0x190] sm:$0xff]
    %v108 = vld [vmem:[#allocation2 + $0x198] sm:$0xff]
    %v109 = vld [vmem:[#allocation2 + $0x1a0] sm:$0xff]
    %v110 = vld [vmem:[#allocation2 + $0x1a8] sm:$0xff]
    %v111 = vld [vmem:[#allocation2 + $0x1b0] sm:$0xff]
    %v112 = vld [vmem:[#allocation2 + $0x1b8] sm:$0xff]
    %v113 = vld [vmem:[#allocation2 + $0x1c0] sm:$0xff]
    %v114 = vld [vmem:[#allocation2 + $0x1c8] sm:$0xff]
    %v115 = vld [vmem:[#allocation2 + $0x1d0] sm:$0xff]
    %v116 = vld [vmem:[#allocation2 + $0x1d8] sm:$0xff]
    %v117 = vld [vmem:[#allocation2 + $0x1e0] sm:$0xff]
    %v118 = vld [vmem:[#allocation2 + $0x1e8] sm:$0xff]
    %v119 = vld [vmem:[#allocation2 + $0x1f0] sm:$0xff]
    %v120 = vld [vmem:[#allocation2 + $0x1f8] sm:$0xff]
    %v121 = vld [vmem:[#allocation2 + $0x200] sm:$0xff]
    %v122 = vld [vmem:[#allocation2 + $0x208] sm:$0xff]
    %v123 = vld [vmem:[#allocation2 + $0x210] sm:$0xff]
    %v124 = vld [vmem:[#allocation2 + $0x218] sm:$0xff]
    %v125 = vld [vmem:[#allocation2 + $0x220] sm:$0xff]
    %v126 = vld [vmem:[#allocation2 + $0x228] sm:$0xff]
    %v127 = vld [vmem:[#allocation2 + $0x230] sm:$0xff]
    %v128 = vld [vmem:[#allocation2 + $0x238] sm:$0xff]
    %v129 = vld [vmem:[#allocation2 + $0x240] sm:$0xff]
    %v130 = vld [vmem:[#allocation2 + $0x248] sm:$0xff]
    %v131 = vld [vmem:[#allocation2 + $0x250] sm:$0xff]
    %v132 = vld [vmem:[#allocation2 + $0x258] sm:$0xff]
    %v133 = vld [vmem:[#allocation2 + $0x260] sm:$0xff]
    %v134 = vld [vmem:[#allocation2 + $0x268] sm:$0xff]
    %v135 = vld [vmem:[#allocation2 + $0x270] sm:$0xff]
    %v136 = vld [vmem:[#allocation2 + $0x278] sm:$0xff]
    %v137 = vld [vmem:[#allocation2 + $0x280] sm:$0xff]
    %v138 = vld [vmem:[#allocation2 + $0x288] sm:$0xff]
    %v139 = vld [vmem:[#allocation2 + $0x290] sm:$0xff]
    %v140 = vld [vmem:[#allocation2 + $0x298] sm:$0xff]
    %v141 = vld [vmem:[#allocation2 + $0x2a0] sm:$0xff]
    %v142 = vld [vmem:[#allocation2 + $0x2a8] sm:$0xff]
    %v143 = vld [vmem:[#allocation2 + $0x2b0] sm:$0xff]
    %v144 = vld [vmem:[#allocation2 + $0x2b8] sm:$0xff]
    %v145 = vld [vmem:[#allocation2 + $0x2c0] sm:$0xff]
    %v146 = vld [vmem:[#allocation2 + $0x2c8] sm:$0xff]
    %v147 = vld [vmem:[#allocation2 + $0x2d0] sm:$0xff]
    %v148 = vld [vmem:[#allocation2 + $0x2d8] sm:$0xff]
    %v149 = vld [vmem:[#allocation2 + $0x2e0] sm:$0xff]
    %v150 = vld [vmem:[#allocation2 + $0x2e8] sm:$0xff]
    %v151 = vld [vmem:[#allocation2 + $0x2f0] sm:$0xff]
    %v152 = vld [vmem:[#allocation2 + $0x2f8] sm:$0xff]
    %v153 = vld [vmem:[#allocation2 + $0x300] sm:$0xff]
    %v154 = vld [vmem:[#allocation2 + $0x308] sm:$0xff]
    %v155 = vld [vmem:[#allocation2 + $0x310] sm:$0xff]
    %v156 = vld [vmem:[#allocation2 + $0x318] sm:$0xff]
    %v157 = vld [vmem:[#allocation2 + $0x320] sm:$0xff]
    %v158 = vld [vmem:[#allocation2 + $0x328] sm:$0xff]
    %v159 = vld [vmem:[#allocation2 + $0x330] sm:$0xff]
    %v160 = vld [vmem:[#allocation2 + $0x338] sm:$0xff]
    %v161 = vld [vmem:[#allocation2 + $0x340] sm:$0xff]
    %v162 = vld [vmem:[#allocation2 + $0x348] sm:$0xff]
    %v163 = vld [vmem:[#allocation2 + $0x350] sm:$0xff]
    %v164 = vld [vmem:[#allocation2 + $0x358] sm:$0xff]
    %v165 = vld [vmem:[#allocation2 + $0x360] sm:$0xff]
    %v166 = vld [vmem:[#allocation2 + $0x368] sm:$0xff]
    %v167 = vld [vmem:[#allocation2 + $0x370] sm:$0xff]
    %v168 = vld [vmem:[#allocation2 + $0x378] sm:$0xff]
    %v169 = vld [vmem:[#allocation2 + $0x380] sm:$0xff]
    %v170 = vld [vmem:[#allocation2 + $0x388] sm:$0xff]
    %v171 = vld [vmem:[#allocation2 + $0x390] sm:$0xff]
    %v172 = vld [vmem:[#allocation2 + $0x398] sm:$0xff]
    %v173 = vld [vmem:[#allocation2 + $0x3a0] sm:$0xff]
    %v174 = vld [vmem:[#allocation2 + $0x3a8] sm:$0xff]
    %v175 = vld [vmem:[#allocation2 + $0x3b0] sm:$0xff]
    %v176 = vld [vmem:[#allocation2 + $0x3b8] sm:$0xff]
    %v177 = vld [vmem:[#allocation2 + $0x3c0] sm:$0xff]
    %v178 = vld [vmem:[#allocation2 + $0x3c8] sm:$0xff]
    %v179 = vld [vmem:[#allocation2 + $0x3d0] sm:$0xff]
    %v180 = vld [vmem:[#allocation2 + $0x3d8] sm:$0xff]
    %v181 = vld [vmem:[#allocation2 + $0x3e0] sm:$0xff]
    %v182 = vld [vmem:[#allocation2 + $0x3e8] sm:$0xff]
    %v183 = vld [vmem:[#allocation2 + $0x3f0] sm:$0xff]
    %v184 = vld [vmem:[#allocation2 + $0x3f8] sm:$0xff]
    %v185 = vld [vmem:[#allocation5] sm:$0xff]
    %v186 = vld [vmem:[#allocation5 + $0x8] sm:$0xff]
    %v187 = vld [vmem:[#allocation5 + $0x10] sm:$0xff]
    %v188 = vld [vmem:[#allocation5 + $0x18] sm:$0xff]
    %v189 = vld [vmem:[#allocation5 + $0x20] sm:$0xff]
    %v190 = vld [vmem:[#allocation5 + $0x28] sm:$0xff]
    %v191 = vld [vmem:[#allocation5 + $0x30] sm:$0xff]
    %v192 = vld [vmem:[#allocation5 + $0x38] sm:$0xff]
    %v193 = vld [vmem:[#allocation5 + $0x40] sm:$0xff]
    %v194 = vld [vmem:[#allocation5 + $0x48] sm:$0xff]
    %v195 = vld [vmem:[#allocation5 + $0x50] sm:$0xff]
    %v196 = vld [vmem:[#allocation5 + $0x58] sm:$0xff]
    %v197 = vld [vmem:[#allocation5 + $0x60] sm:$0xff]
    %v198 = vld [vmem:[#allocation5 + $0x68] sm:$0xff]
    %v199 = vld [vmem:[#allocation5 + $0x70] sm:$0xff]
    %v200 = vld [vmem:[#allocation5 + $0x78] sm:$0xff]
    %v201 = vld [vmem:[#allocation5 + $0x80] sm:$0xff]
    %v202 = vld [vmem:[#allocation5 + $0x88] sm:$0xff]
    %v203 = vld [vmem:[#allocation5 + $0x90] sm:$0xff]
    %v204 = vld [vmem:[#allocation5 + $0x98] sm:$0xff]
    %v205 = vld [vmem:[#allocation5 + $0xa0] sm:$0xff]
    %v206 = vld [vmem:[#allocation5 + $0xa8] sm:$0xff]
    %v207 = vld [vmem:[#allocation5 + $0xb0] sm:$0xff]
    %v208 = vld [vmem:[#allocation5 + $0xb8] sm:$0xff]
    %v209 = vld [vmem:[#allocation5 + $0xc0] sm:$0xff]
    %v210 = vld [vmem:[#allocation5 + $0xc8] sm:$0xff]
    %v211 = vld [vmem:[#allocation5 + $0xd0] sm:$0xff]
    %v212 = vld [vmem:[#allocation5 + $0xd8] sm:$0xff]
    %v213 = vld [vmem:[#allocation5 + $0xe0] sm:$0xff]
    %v214 = vld [vmem:[#allocation5 + $0xe8] sm:$0xff]
    %v215 = vld [vmem:[#allocation5 + $0xf0] sm:$0xff]
    %v216 = vld [vmem:[#allocation5 + $0xf8] sm:$0xff]
    %v217 = vld [vmem:[#allocation5 + $0x100] sm:$0xff]
    %v218 = vld [vmem:[#allocation5 + $0x108] sm:$0xff]
    %v219 = vld [vmem:[#allocation5 + $0x110] sm:$0xff]
    %v220 = vld [vmem:[#allocation5 + $0x118] sm:$0xff]
    %v221 = vld [vmem:[#allocation5 + $0x120] sm:$0xff]
    %v222 = vld [vmem:[#allocation5 + $0x128] sm:$0xff]
    %v223 = vld [vmem:[#allocation5 + $0x130] sm:$0xff]
    %v224 = vld [vmem:[#allocation5 + $0x138] sm:$0xff]
    %v225 = vld [vmem:[#allocation5 + $0x140] sm:$0xff]
    %v226 = vld [vmem:[#allocation5 + $0x148] sm:$0xff]
    %v227 = vld [vmem:[#allocation5 + $0x150] sm:$0xff]
    %v228 = vld [vmem:[#allocation5 + $0x158] sm:$0xff]
    %v229 = vld [vmem:[#allocation5 + $0x160] sm:$0xff]
    %v230 = vld [vmem:[#allocation5 + $0x168] sm:$0xff]
    %v231 = vld [vmem:[#allocation5 + $0x170] sm:$0xff]
    %v232 = vld [vmem:[#allocation5 + $0x178] sm:$0xff]
    %v233 = vld [vmem:[#allocation5 + $0x180] sm:$0xff]
    %v234 = vld [vmem:[#allocation5 + $0x188] sm:$0xff]
    %v235 = vld [vmem:[#allocation5 + $0x190] sm:$0xff]
    %v236 = vld [vmem:[#allocation5 + $0x198] sm:$0xff]
    %v237 = vld [vmem:[#allocation5 + $0x1a0] sm:$0xff]
    %v238 = vld [vmem:[#allocation5 + $0x1a8] sm:$0xff]
    %v239 = vld [vmem:[#allocation5 + $0x1b0] sm:$0xff]
    %v240 = vld [vmem:[#allocation5 + $0x1b8] sm:$0xff]
    %v241 = vld [vmem:[#allocation5 + $0x1c0] sm:$0xff]
    %v242 = vld [vmem:[#allocation5 + $0x1c8] sm:$0xff]
    %v243 = vld [vmem:[#allocation5 + $0x1d0] sm:$0xff]
    %v244 = vld [vmem:[#allocation5 + $0x1d8] sm:$0xff]
    %v245 = vld [vmem:[#allocation5 + $0x1e0] sm:$0xff]
    %v246 = vld [vmem:[#allocation5 + $0x1e8] sm:$0xff]
    %v247 = vld [vmem:[#allocation5 + $0x1f0] sm:$0xff]
    %v248 = vld [vmem:[#allocation5 + $0x1f8] sm:$0xff]
    %v249 = vld [vmem:[#allocation5 + $0x200] sm:$0xff]
    %v250 = vld [vmem:[#allocation5 + $0x208] sm:$0xff]
    %v251 = vld [vmem:[#allocation5 + $0x210] sm:$0xff]
    %v252 = vld [vmem:[#allocation5 + $0x218] sm:$0xff]
    %v253 = vld [vmem:[#allocation5 + $0x220] sm:$0xff]
    %v254 = vld [vmem:[#allocation5 + $0x228] sm:$0xff]
    %v255 = vld [vmem:[#allocation5 + $0x230] sm:$0xff]
    %v256 = vld [vmem:[#allocation5 + $0x238] sm:$0xff]
    %v257 = vld [vmem:[#allocation5 + $0x240] sm:$0xff]
    %v258 = vld [vmem:[#allocation5 + $0x248] sm:$0xff]
    %v259 = vld [vmem:[#allocation5 + $0x250] sm:$0xff]
    %v260 = vld [vmem:[#allocation5 + $0x258] sm:$0xff]
    %v261 = vld [vmem:[#allocation5 + $0x260] sm:$0xff]
    %v262 = vld [vmem:[#allocation5 + $0x268] sm:$0xff]
    %v263 = vld [vmem:[#allocation5 + $0x270] sm:$0xff]
    %v264 = vld [vmem:[#allocation5 + $0x278] sm:$0xff]
    %v265 = vld [vmem:[#allocation5 + $0x280] sm:$0xff]
    %v266 = vld [vmem:[#allocation5 + $0x288] sm:$0xff]
    %v267 = vld [vmem:[#allocation5 + $0x290] sm:$0xff]
    %v268 = vld [vmem:[#allocation5 + $0x298] sm:$0xff]
    %v269 = vld [vmem:[#allocation5 + $0x2a0] sm:$0xff]
    %v270 = vld [vmem:[#allocation5 + $0x2a8] sm:$0xff]
    %v271 = vld [vmem:[#allocation5 + $0x2b0] sm:$0xff]
    %v272 = vld [vmem:[#allocation5 + $0x2b8] sm:$0xff]
    %v273 = vld [vmem:[#allocation5 + $0x2c0] sm:$0xff]
    %v274 = vld [vmem:[#allocation5 + $0x2c8] sm:$0xff]
    %v275 = vld [vmem:[#allocation5 + $0x2d0] sm:$0xff]
    %v276 = vld [vmem:[#allocation5 + $0x2d8] sm:$0xff]
    %v277 = vld [vmem:[#allocation5 + $0x2e0] sm:$0xff]
    %v278 = vld [vmem:[#allocation5 + $0x2e8] sm:$0xff]
    %v279 = vld [vmem:[#allocation5 + $0x2f0] sm:$0xff]
    %v280 = vld [vmem:[#allocation5 + $0x2f8] sm:$0xff]
    %v281 = vld [vmem:[#allocation5 + $0x300] sm:$0xff]
    %v282 = vld [vmem:[#allocation5 + $0x308] sm:$0xff]
    %v283 = vld [vmem:[#allocation5 + $0x310] sm:$0xff]
    %v284 = vld [vmem:[#allocation5 + $0x318] sm:$0xff]
    %v285 = vld [vmem:[#allocation5 + $0x320] sm:$0xff]
    %v286 = vld [vmem:[#allocation5 + $0x328] sm:$0xff]
    %v287 = vld [vmem:[#allocation5 + $0x330] sm:$0xff]
    %v288 = vld [vmem:[#allocation5 + $0x338] sm:$0xff]
    %v289 = vld [vmem:[#allocation5 + $0x340] sm:$0xff]
    %v290 = vld [vmem:[#allocation5 + $0x348] sm:$0xff]
    %v291 = vld [vmem:[#allocation5 + $0x350] sm:$0xff]
    %v292 = vld [vmem:[#allocation5 + $0x358] sm:$0xff]
    %v293 = vld [vmem:[#allocation5 + $0x360] sm:$0xff]
    %v294 = vld [vmem:[#allocation5 + $0x368] sm:$0xff]
    %v295 = vld [vmem:[#allocation5 + $0x370] sm:$0xff]
    %v296 = vld [vmem:[#allocation5 + $0x378] sm:$0xff]
    %v297 = vld [vmem:[#allocation5 + $0x380] sm:$0xff]
    %v298 = vld [vmem:[#allocation5 + $0x388] sm:$0xff]
    %v299 = vld [vmem:[#allocation5 + $0x390] sm:$0xff]
    %v300 = vld [vmem:[#allocation5 + $0x398] sm:$0xff]
    %v301 = vld [vmem:[#allocation5 + $0x3a0] sm:$0xff]
    %v302 = vld [vmem:[#allocation5 + $0x3a8] sm:$0xff]
    %v303 = vld [vmem:[#allocation5 + $0x3b0] sm:$0xff]
    %v304 = vld [vmem:[#allocation5 + $0x3b8] sm:$0xff]
    %v305 = vld [vmem:[#allocation5 + $0x3c0] sm:$0xff]
    %v306 = vld [vmem:[#allocation5 + $0x3c8] sm:$0xff]
    %v307 = vld [vmem:[#allocation5 + $0x3d0] sm:$0xff]
    %v308 = vld [vmem:[#allocation5 + $0x3d8] sm:$0xff]
    %v309 = vld [vmem:[#allocation5 + $0x3e0] sm:$0xff]
    %v310 = vld [vmem:[#allocation5 + $0x3e8] sm:$0xff]
    %v311 = vld [vmem:[#allocation5 + $0x3f0] sm:$0xff]
    %v312 = vld [vmem:[#allocation5 + $0x3f8] sm:$0xff]
    %v313 = vmul.f32 %v57, %v57
    %v314 = vmul.f32 %v58, %v58
    %v315 = vmul.f32 %v59, %v59
    %v316 = vmul.f32 %v60, %v60
    %v317 = vmul.f32 %v61, %v61
    %v318 = vmul.f32 %v62, %v62
    %v319 = vmul.f32 %v63, %v63
    %v320 = vmul.f32 %v64, %v64
    %v321 = vmul.f32 %v65, %v65
    %v322 = vmul.f32 %v66, %v66
    %v323 = vmul.f32 %v67, %v67
    %v324 = vmul.f32 %v68, %v68
    %v325 = vmul.f32 %v69, %v69
    %v326 = vmul.f32 %v70, %v70
    %v327 = vmul.f32 %v71, %v71
    %v328 = vmul.f32 %v72, %v72
    %v329 = vmul.f32 %v73, %v73
    %v330 = vmul.f32 %v74, %v74
    %v331 = vmul.f32 %v75, %v75
    %v332 = vmul.f32 %v76, %v76
    %v333 = vmul.f32 %v77, %v77
    %v334 = vmul.f32 %v78, %v78
    %v335 = vmul.f32 %v79, %v79
    %v336 = vmul.f32 %v80, %v80
    %v337 = vmul.f32 %v81, %v81
    %v338 = vmul.f32 %v82, %v82
    %v339 = vmul.f32 %v83, %v83
    %v340 = vmul.f32 %v84, %v84
    %v341 = vmul.f32 %v85, %v85
    %v342 = vmul.f32 %v86, %v86
    %v343 = vmul.f32 %v87, %v87
    %v344 = vmul.f32 %v88, %v88
    %v345 = vmul.f32 %v89, %v89
    %v346 = vmul.f32 %v90, %v90
    %v347 = vmul.f32 %v91, %v91
    %v348 = vmul.f32 %v92, %v92
    %v349 = vmul.f32 %v93, %v93
    %v350 = vmul.f32 %v94, %v94
    %v351 = vmul.f32 %v95, %v95
    %v352 = vmul.f32 %v96, %v96
    %v353 = vmul.f32 %v97, %v97
    %v354 = vmul.f32 %v98, %v98
    %v355 = vmul.f32 %v99, %v99
    %v356 = vmul.f32 %v100, %v100
    %v357 = vmul.f32 %v101, %v101
    %v358 = vmul.f32 %v102, %v102
    %v359 = vmul.f32 %v103, %v103
    %v360 = vmul.f32 %v104, %v104
    %v361 = vmul.f32 %v105, %v105
    %v362 = vmul.f32 %v106, %v106
    %v363 = vmul.f32 %v107, %v107
    %v364 = vmul.f32 %v108, %v108
    %v365 = vmul.f32 %v109, %v109
    %v366 = vmul.f32 %v110, %v110
    %v367 = vmul.f32 %v111, %v111
    %v368 = vmul.f32 %v112, %v112
    %v369 = vmul.f32 %v113, %v113
    %v370 = vmul.f32 %v114, %v114
    %v371 = vmul.f32 %v115, %v115
    %v372 = vmul.f32 %v116, %v116
    %v373 = vmul.f32 %v117, %v117
    %v374 = vmul.f32 %v118, %v118
    %v375 = vmul.f32 %v119, %v119
    %v376 = vmul.f32 %v120, %v120
    %v377 = vmul.f32 %v121, %v121
    %v378 = vmul.f32 %v122, %v122
    %v379 = vmul.f32 %v123, %v123
    %v380 = vmul.f32 %v124, %v124
    %v381 = vmul.f32 %v125, %v125
    %v382 = vmul.f32 %v126, %v126
    %v383 = vmul.f32 %v127, %v127
    %v384 = vmul.f32 %v128, %v128
    %v385 = vmul.f32 %v129, %v129
    %v386 = vmul.f32 %v130, %v130
    %v387 = vmul.f32 %v131, %v131
    %v388 = vmul.f32 %v132, %v132
    %v389 = vmul.f32 %v133, %v133
    %v390 = vmul.f32 %v134, %v134
    %v391 = vmul.f32 %v135, %v135
    %v392 = vmul.f32 %v136, %v136
    %v393 = vmul.f32 %v137, %v137
    %v394 = vmul.f32 %v138, %v138
    %v395 = vmul.f32 %v139, %v139
    %v396 = vmul.f32 %v140, %v140
    %v397 = vmul.f32 %v141, %v141
    %v398 = vmul.f32 %v142, %v142
    %v399 = vmul.f32 %v143, %v143
    %v400 = vmul.f32 %v144, %v144
    %v401 = vmul.f32 %v145, %v145
    %v402 = vmul.f32 %v146, %v146
    %v403 = vmul.f32 %v147, %v147
    %v404 = vmul.f32 %v148, %v148
    %v405 = vmul.f32 %v149, %v149
    %v406 = vmul.f32 %v150, %v150
    %v407 = vmul.f32 %v151, %v151
    %v408 = vmul.f32 %v152, %v152
    %v409 = vmul.f32 %v153, %v153
    %v410 = vmul.f32 %v154, %v154
    %v411 = vmul.f32 %v155, %v155
    %v412 = vmul.f32 %v156, %v156
    %v413 = vmul.f32 %v157, %v157
    %v414 = vmul.f32 %v158, %v158
    %v415 = vmul.f32 %v159, %v159
    %v416 = vmul.f32 %v160, %v160
    %v417 = vmul.f32 %v161, %v161
    %v418 = vmul.f32 %v162, %v162
    %v419 = vmul.f32 %v163, %v163
    %v420 = vmul.f32 %v164, %v164
    %v421 = vmul.f32 %v165, %v165
    %v422 = vmul.f32 %v166, %v166
    %v423 = vmul.f32 %v167, %v167
    %v424 = vmul.f32 %v168, %v168
    %v425 = vmul.f32 %v169, %v169
    %v426 = vmul.f32 %v170, %v170
    %v427 = vmul.f32 %v171, %v171
    %v428 = vmul.f32 %v172, %v172
    %v429 = vmul.f32 %v173, %v173
    %v430 = vmul.f32 %v174, %v174
    %v431 = vmul.f32 %v175, %v175
    %v432 = vmul.f32 %v176, %v176
    %v433 = vmul.f32 %v177, %v177
    %v434 = vmul.f32 %v178, %v178
    %v435 = vmul.f32 %v179, %v179
    %v436 = vmul.f32 %v180, %v180
    %v437 = vmul.f32 %v181, %v181
    %v438 = vmul.f32 %v182, %v182
    %v439 = vmul.f32 %v183, %v183
    %v440 = vmul.f32 %v184, %v184
    %v441 = vsub.f32 -2.8025851, %v185
    %v442 = vsub.f32 -2.8025851, %v186
    %v443 = vsub.f32 -2.8025851, %v187
    %v444 = vsub.f32 -2.8025851, %v188
    %v445 = vsub.f32 -2.8025851, %v189
    %v446 = vsub.f32 -2.8025851, %v190
    %v447 = vsub.f32 -2.8025851, %v191
    %v448 = vsub.f32 -2.8025851, %v192
    %v449 = vsub.f32 -2.8025851, %v193
    %v450 = vsub.f32 -2.8025851, %v194
    %v451 = vsub.f32 -2.8025851, %v195
    %v452 = vsub.f32 -2.8025851, %v196
    %v453 = vsub.f32 -2.8025851, %v197
    %v454 = vsub.f32 -2.8025851, %v198
    %v455 = vsub.f32 -2.8025851, %v199
    %v456 = vsub.f32 -2.8025851, %v200
    %v457 = vsub.f32 -2.8025851, %v201
    %v458 = vsub.f32 -2.8025851, %v202
    %v459 = vsub.f32 -2.8025851, %v203
    %v460 = vsub.f32 -2.8025851, %v204
    %v461 = vsub.f32 -2.8025851, %v205
    %v462 = vsub.f32 -2.8025851, %v206
    %v463 = vsub.f32 -2.8025851, %v207
    %v464 = vsub.f32 -2.8025851, %v208
    %v465 = vsub.f32 -2.8025851, %v209
    %v466 = vsub.f32 -2.8025851, %v210
    %v467 = vsub.f32 -2.8025851, %v211
    %v468 = vsub.f32 -2.8025851, %v212
    %v469 = vsub.f32 -2.8025851, %v213
    %v470 = vsub.f32 -2.8025851, %v214
    %v471 = vsub.f32 -2.8025851, %v215
    %v472 = vsub.f32 -2.8025851, %v216
    %v473 = vsub.f32 -2.8025851, %v217
    %v474 = vsub.f32 -2.8025851, %v218
    %v475 = vsub.f32 -2.8025851, %v219
    %v476 = vsub.f32 -2.8025851, %v220
    %v477 = vsub.f32 -2.8025851, %v221
    %v478 = vsub.f32 -2.8025851, %v222
    %v479 = vsub.f32 -2.8025851, %v223
    %v480 = vsub.f32 -2.8025851, %v224
    %v481 = vsub.f32 -2.8025851, %v225
    %v482 = vsub.f32 -2.8025851, %v226
    %v483 = vsub.f32 -2.8025851, %v227
    %v484 = vsub.f32 -2.8025851, %v228
    %v485 = vsub.f32 -2.8025851, %v229
    %v486 = vsub.f32 -2.8025851, %v230
    %v487 = vsub.f32 -2.8025851, %v231
    %v488 = vsub.f32 -2.8025851, %v232
    %v489 = vsub.f32 -2.8025851, %v233
    %v490 = vsub.f32 -2.8025851, %v234
    %v491 = vsub.f32 -2.8025851, %v235
    %v492 = vsub.f32 -2.8025851, %v236
    %v493 = vsub.f32 -2.8025851, %v237
    %v494 = vsub.f32 -2.8025851, %v238
    %v495 = vsub.f32 -2.8025851, %v239
    %v496 = vsub.f32 -2.8025851, %v240
    %v497 = vsub.f32 -2.8025851, %v241
    %v498 = vsub.f32 -2.8025851, %v242
    %v499 = vsub.f32 -2.8025851, %v243
    %v500 = vsub.f32 -2.8025851, %v244
    %v501 = vsub.f32 -2.8025851, %v245
    %v502 = vsub.f32 -2.8025851, %v246
    %v503 = vsub.f32 -2.8025851, %v247
    %v504 = vsub.f32 -2.8025851, %v248
    %v505 = vsub.f32 -2.8025851, %v249
    %v506 = vsub.f32 -2.8025851, %v250
    %v507 = vsub.f32 -2.8025851, %v251
    %v508 = vsub.f32 -2.8025851, %v252
    %v509 = vsub.f32 -2.8025851, %v253
    %v510 = vsub.f32 -2.8025851, %v254
    %v511 = vsub.f32 -2.8025851, %v255
    %v512 = vsub.f32 -2.8025851, %v256
    %v513 = vsub.f32 -2.8025851, %v257
    %v514 = vsub.f32 -2.8025851, %v258
    %v515 = vsub.f32 -2.8025851, %v259
    %v516 = vsub.f32 -2.8025851, %v260
    %v517 = vsub.f32 -2.8025851, %v261
    %v518 = vsub.f32 -2.8025851, %v262
    %v519 = vsub.f32 -2.8025851, %v263
    %v520 = vsub.f32 -2.8025851, %v264
    %v521 = vsub.f32 -2.8025851, %v265
    %v522 = vsub.f32 -2.8025851, %v266
    %v523 = vsub.f32 -2.8025851, %v267
    %v524 = vsub.f32 -2.8025851, %v268
    %v525 = vsub.f32 -2.8025851, %v269
    %v526 = vsub.f32 -2.8025851, %v270
    %v527 = vsub.f32 -2.8025851, %v271
    %v528 = vsub.f32 -2.8025851, %v272
    %v529 = vsub.f32 -2.8025851, %v273
    %v530 = vsub.f32 -2.8025851, %v274
    %v531 = vsub.f32 -2.8025851, %v275
    %v532 = vsub.f32 -2.8025851, %v276
    %v533 = vsub.f32 -2.8025851, %v277
    %v534 = vsub.f32 -2.8025851, %v278
    %v535 = vsub.f32 -2.8025851, %v279
    %v536 = vsub.f32 -2.8025851, %v280
    %v537 = vsub.f32 -2.8025851, %v281
    %v538 = vsub.f32 -2.8025851, %v282
    %v539 = vsub.f32 -2.8025851, %v283
    %v540 = vsub.f32 -2.8025851, %v284
    %v541 = vsub.f32 -2.8025851, %v285
    %v542 = vsub.f32 -2.8025851, %v286
    %v543 = vsub.f32 -2.8025851, %v287
    %v544 = vsub.f32 -2.8025851, %v288
    %v545 = vsub.f32 -2.8025851, %v289
    %v546 = vsub.f32 -2.8025851, %v290
    %v547 = vsub.f32 -2.8025851, %v291
    %v548 = vsub.f32 -2.8025851, %v292
    %v549 = vsub.f32 -2.8025851, %v293
    %v550 = vsub.f32 -2.8025851, %v294
    %v551 = vsub.f32 -2.8025851, %v295
    %v552 = vsub.f32 -2.8025851, %v296
    %v553 = vsub.f32 -2.8025851, %v297
    %v554 = vsub.f32 -2.8025851, %v298
    %v555 = vsub.f32 -2.8025851, %v299
    %v556 = vsub.f32 -2.8025851, %v300
    %v557 = vsub.f32 -2.8025851, %v301
    %v558 = vsub.f32 -2.8025851, %v302
    %v559 = vsub.f32 -2.8025851, %v303
    %v560 = vsub.f32 -2.8025851, %v304
    %v561 = vsub.f32 -2.8025851, %v305
    %v562 = vsub.f32 -2.8025851, %v306
    %v563 = vsub.f32 -2.8025851, %v307
    %v564 = vsub.f32 -2.8025851, %v308
    %v565 = vsub.f32 -2.8025851, %v309
    %v566 = vsub.f32 -2.8025851, %v310
    %v567 = vsub.f32 -2.8025851, %v311
    %v568 = vsub.f32 -2.8025851, %v312
    %v569 = vmul.f32 %v185, 2.0
    %v570 = vmul.f32 %v186, 2.0
    %v571 = vmul.f32 %v187, 2.0
    %v572 = vmul.f32 %v188, 2.0
    %v573 = vmul.f32 %v189, 2.0
    %v574 = vmul.f32 %v190, 2.0
    %v575 = vmul.f32 %v191, 2.0
    %v576 = vmul.f32 %v192, 2.0
    %v577 = vmul.f32 %v193, 2.0
    %v578 = vmul.f32 %v194, 2.0
    %v579 = vmul.f32 %v195, 2.0
    %v580 = vmul.f32 %v196, 2.0
    %v581 = vmul.f32 %v197, 2.0
    %v582 = vmul.f32 %v198, 2.0
    %v583 = vmul.f32 %v199, 2.0
    %v584 = vmul.f32 %v200, 2.0
    %v585 = vmul.f32 %v201, 2.0
    %v586 = vmul.f32 %v202, 2.0
    %v587 = vmul.f32 %v203, 2.0
    %v588 = vmul.f32 %v204, 2.0
    %v589 = vmul.f32 %v205, 2.0
    %v590 = vmul.f32 %v206, 2.0
    %v591 = vmul.f32 %v207, 2.0
    %v592 = vmul.f32 %v208, 2.0
    %v593 = vmul.f32 %v209, 2.0
    %v594 = vmul.f32 %v210, 2.0
    %v595 = vmul.f32 %v211, 2.0
    %v596 = vmul.f32 %v212, 2.0
    %v597 = vmul.f32 %v213, 2.0
    %v598 = vmul.f32 %v214, 2.0
    %v599 = vmul.f32 %v215, 2.0
    %v600 = vmul.f32 %v216, 2.0
    %v601 = vmul.f32 %v217, 2.0
    %v602 = vmul.f32 %v218, 2.0
    %v603 = vmul.f32 %v219, 2.0
    %v604 = vmul.f32 %v220, 2.0
    %v605 = vmul.f32 %v221, 2.0
    %v606 = vmul.f32 %v222, 2.0
    %v607 = vmul.f32 %v223, 2.0
    %v608 = vmul.f32 %v224, 2.0
    %v609 = vmul.f32 %v225, 2.0
    %v610 = vmul.f32 %v226, 2.0
    %v611 = vmul.f32 %v227, 2.0
    %v612 = vmul.f32 %v228, 2.0
    %v613 = vmul.f32 %v229, 2.0
    %v614 = vmul.f32 %v230, 2.0
    %v615 = vmul.f32 %v231, 2.0
    %v616 = vmul.f32 %v232, 2.0
    %v617 = vmul.f32 %v233, 2.0
    %v618 = vmul.f32 %v234, 2.0
    %v619 = vmul.f32 %v235, 2.0
    %v620 = vmul.f32 %v236, 2.0
    %v621 = vmul.f32 %v237, 2.0
    %v622 = vmul.f32 %v238, 2.0
    %v623 = vmul.f32 %v239, 2.0
    %v624 = vmul.f32 %v240, 2.0
    %v625 = vmul.f32 %v241, 2.0
    %v626 = vmul.f32 %v242, 2.0
    %v627 = vmul.f32 %v243, 2.0
    %v628 = vmul.f32 %v244, 2.0
    %v629 = vmul.f32 %v245, 2.0
    %v630 = vmul.f32 %v246, 2.0
    %v631 = vmul.f32 %v247, 2.0
    %v632 = vmul.f32 %v248, 2.0
    %v633 = vmul.f32 %v249, 2.0
    %v634 = vmul.f32 %v250, 2.0
    %v635 = vmul.f32 %v251, 2.0
    %v636 = vmul.f32 %v252, 2.0
    %v637 = vmul.f32 %v253, 2.0
    %v638 = vmul.f32 %v254, 2.0
    %v639 = vmul.f32 %v255, 2.0
    %v640 = vmul.f32 %v256, 2.0
    %v641 = vmul.f32 %v257, 2.0
    %v642 = vmul.f32 %v258, 2.0
    %v643 = vmul.f32 %v259, 2.0
    %v644 = vmul.f32 %v260, 2.0
    %v645 = vmul.f32 %v261, 2.0
    %v646 = vmul.f32 %v262, 2.0
    %v647 = vmul.f32 %v263, 2.0
    %v648 = vmul.f32 %v264, 2.0
    %v649 = vmul.f32 %v265, 2.0
    %v650 = vmul.f32 %v266, 2.0
    %v651 = vmul.f32 %v267, 2.0
    %v652 = vmul.f32 %v268, 2.0
    %v653 = vmul.f32 %v269, 2.0
    %v654 = vmul.f32 %v270, 2.0
    %v655 = vmul.f32 %v271, 2.0
    %v656 = vmul.f32 %v272, 2.0
    %v657 = vmul.f32 %v273, 2.0
    %v658 = vmul.f32 %v274, 2.0
    %v659 = vmul.f32 %v275, 2.0
    %v660 = vmul.f32 %v276, 2.0
    %v661 = vmul.f32 %v277, 2.0
    %v662 = vmul.f32 %v278, 2.0
    %v663 = vmul.f32 %v279, 2.0
    %v664 = vmul.f32 %v280, 2.0
    %v665 = vmul.f32 %v281, 2.0
    %v666 = vmul.f32 %v282, 2.0
    %v667 = vmul.f32 %v283, 2.0
    %v668 = vmul.f32 %v284, 2.0
    %v669 = vmul.f32 %v285, 2.0
    %v670 = vmul.f32 %v286, 2.0
    %v671 = vmul.f32 %v287, 2.0
    %v672 = vmul.f32 %v288, 2.0
    %v673 = vmul.f32 %v289, 2.0
    %v674 = vmul.f32 %v290, 2.0
    %v675 = vmul.f32 %v291, 2.0
    %v676 = vmul.f32 %v292, 2.0
    %v677 = vmul.f32 %v293, 2.0
    %v678 = vmul.f32 %v294, 2.0
    %v679 = vmul.f32 %v295, 2.0
    %v680 = vmul.f32 %v296, 2.0
    %v681 = vmul.f32 %v297, 2.0
    %v682 = vmul.f32 %v298, 2.0
    %v683 = vmul.f32 %v299, 2.0
    %v684 = vmul.f32 %v300, 2.0
    %v685 = vmul.f32 %v301, 2.0
    %v686 = vmul.f32 %v302, 2.0
    %v687 = vmul.f32 %v303, 2.0
    %v688 = vmul.f32 %v304, 2.0
    %v689 = vmul.f32 %v305, 2.0
    %v690 = vmul.f32 %v306, 2.0
    %v691 = vmul.f32 %v307, 2.0
    %v692 = vmul.f32 %v308, 2.0
    %v693 = vmul.f32 %v309, 2.0
    %v694 = vmul.f32 %v310, 2.0
    %v695 = vmul.f32 %v311, 2.0
    %v696 = vmul.f32 %v312, 2.0
    %v697 = vmul.f32 %v569, 1.442695
    %v698 = vpow.pop %v697
    %v699 = vmul.f32 %v570, 1.442695
    %v700 = vpow.pop %v699
    %v701 = vmul.f32 %v571, 1.442695
    %v702 = vpow.pop %v701
    %v703 = vmul.f32 %v572, 1.442695
    %v704 = vpow.pop %v703
    %v705 = vmul.f32 %v573, 1.442695
    %v706 = vpow.pop %v705
    %v707 = vmul.f32 %v574, 1.442695
    %v708 = vpow.pop %v707
    %v709 = vmul.f32 %v575, 1.442695
    %v710 = vpow.pop %v709
    %v711 = vmul.f32 %v576, 1.442695
    %v712 = vpow.pop %v711
    %v713 = vmul.f32 %v577, 1.442695
    %v714 = vpow.pop %v713
    %v715 = vmul.f32 %v578, 1.442695
    %v716 = vpow.pop %v715
    %v717 = vmul.f32 %v579, 1.442695
    %v718 = vpow.pop %v717
    %v719 = vmul.f32 %v580, 1.442695
    %v720 = vpow.pop %v719
    %v721 = vmul.f32 %v581, 1.442695
    %v722 = vpow.pop %v721
    %v723 = vmul.f32 %v582, 1.442695
    %v724 = vpow.pop %v723
    %v725 = vmul.f32 %v583, 1.442695
    %v726 = vpow.pop %v725
    %v727 = vmul.f32 %v584, 1.442695
    %v728 = vpow.pop %v727
    %v729 = vmul.f32 %v585, 1.442695
    %v730 = vpow.pop %v729
    %v731 = vmul.f32 %v586, 1.442695
    %v732 = vpow.pop %v731
    %v733 = vmul.f32 %v587, 1.442695
    %v734 = vpow.pop %v733
    %v735 = vmul.f32 %v588, 1.442695
    %v736 = vpow.pop %v735
    %v737 = vmul.f32 %v589, 1.442695
    %v738 = vpow.pop %v737
    %v739 = vmul.f32 %v590, 1.442695
    %v740 = vpow.pop %v739
    %v741 = vmul.f32 %v591, 1.442695
    %v742 = vpow.pop %v741
    %v743 = vmul.f32 %v592, 1.442695
    %v744 = vpow.pop %v743
    %v745 = vmul.f32 %v593, 1.442695
    %v746 = vpow.pop %v745
    %v747 = vmul.f32 %v594, 1.442695
    %v748 = vpow.pop %v747
    %v749 = vmul.f32 %v595, 1.442695
    %v750 = vpow.pop %v749
    %v751 = vmul.f32 %v596, 1.442695
    %v752 = vpow.pop %v751
    %v753 = vmul.f32 %v597, 1.442695
    %v754 = vpow.pop %v753
    %v755 = vmul.f32 %v598, 1.442695
    %v756 = vpow.pop %v755
    %v757 = vmul.f32 %v599, 1.442695
    %v758 = vpow.pop %v757
    %v759 = vmul.f32 %v600, 1.442695
    %v760 = vpow.pop %v759
    %v761 = vmul.f32 %v601, 1.442695
    %v762 = vpow.pop %v761
    %v763 = vmul.f32 %v602, 1.442695
    %v764 = vpow.pop %v763
    %v765 = vmul.f32 %v603, 1.442695
    %v766 = vpow.pop %v765
    %v767 = vmul.f32 %v604, 1.442695
    %v768 = vpow.pop %v767
    %v769 = vmul.f32 %v605, 1.442695
    %v770 = vpow.pop %v769
    %v771 = vmul.f32 %v606, 1.442695
    %v772 = vpow.pop %v771
    %v773 = vmul.f32 %v607, 1.442695
    %v774 = vpow.pop %v773
    %v775 = vmul.f32 %v608, 1.442695
    %v776 = vpow.pop %v775
    %v777 = vmul.f32 %v609, 1.442695
    %v778 = vpow.pop %v777
    %v779 = vmul.f32 %v610, 1.442695
    %v780 = vpow.pop %v779
    %v781 = vmul.f32 %v611, 1.442695
    %v782 = vpow.pop %v781
    %v783 = vmul.f32 %v612, 1.442695
    %v784 = vpow.pop %v783
    %v785 = vmul.f32 %v613, 1.442695
    %v786 = vpow.pop %v785
    %v787 = vmul.f32 %v614, 1.442695
    %v788 = vpow.pop %v787
    %v789 = vmul.f32 %v615, 1.442695
    %v790 = vpow.pop %v789
    %v791 = vmul.f32 %v616, 1.442695
    %v792 = vpow.pop %v791
    %v793 = vmul.f32 %v617, 1.442695
    %v794 = vpow.pop %v793
    %v795 = vmul.f32 %v618, 1.442695
    %v796 = vpow.pop %v795
    %v797 = vmul.f32 %v619, 1.442695
    %v798 = vpow.pop %v797
    %v799 = vmul.f32 %v620, 1.442695
    %v800 = vpow.pop %v799
    %v801 = vmul.f32 %v621, 1.442695
    %v802 = vpow.pop %v801
    %v803 = vmul.f32 %v622, 1.442695
    %v804 = vpow.pop %v803
    %v805 = vmul.f32 %v623, 1.442695
    %v806 = vpow.pop %v805
    %v807 = vmul.f32 %v624, 1.442695
    %v808 = vpow.pop %v807
    %v809 = vmul.f32 %v625, 1.442695
    %v810 = vpow.pop %v809
    %v811 = vmul.f32 %v626, 1.442695
    %v812 = vpow.pop %v811
    %v813 = vmul.f32 %v627, 1.442695
    %v814 = vpow.pop %v813
    %v815 = vmul.f32 %v628, 1.442695
    %v816 = vpow.pop %v815
    %v817 = vmul.f32 %v629, 1.442695
    %v818 = vpow.pop %v817
    %v819 = vmul.f32 %v630, 1.442695
    %v820 = vpow.pop %v819
    %v821 = vmul.f32 %v631, 1.442695
    %v822 = vpow.pop %v821
    %v823 = vmul.f32 %v632, 1.442695
    %v824 = vpow.pop %v823
    %v825 = vmul.f32 %v633, 1.442695
    %v826 = vpow.pop %v825
    %v827 = vmul.f32 %v634, 1.442695
    %v828 = vpow.pop %v827
    %v829 = vmul.f32 %v635, 1.442695
    %v830 = vpow.pop %v829
    %v831 = vmul.f32 %v636, 1.442695
    %v832 = vpow.pop %v831
    %v833 = vmul.f32 %v637, 1.442695
    %v834 = vpow.pop %v833
    %v835 = vmul.f32 %v638, 1.442695
    %v836 = vpow.pop %v835
    %v837 = vmul.f32 %v639, 1.442695
    %v838 = vpow.pop %v837
    %v839 = vmul.f32 %v640, 1.442695
    %v840 = vpow.pop %v839
    %v841 = vmul.f32 %v641, 1.442695
    %v842 = vpow.pop %v841
    %v843 = vmul.f32 %v642, 1.442695
    %v844 = vpow.pop %v843
    %v845 = vmul.f32 %v643, 1.442695
    %v846 = vpow.pop %v845
    %v847 = vmul.f32 %v644, 1.442695
    %v848 = vpow.pop %v847
    %v849 = vmul.f32 %v645, 1.442695
    %v850 = vpow.pop %v849
    %v851 = vmul.f32 %v646, 1.442695
    %v852 = vpow.pop %v851
    %v853 = vmul.f32 %v647, 1.442695
    %v854 = vpow.pop %v853
    %v855 = vmul.f32 %v648, 1.442695
    %v856 = vpow.pop %v855
    %v857 = vmul.f32 %v649, 1.442695
    %v858 = vpow.pop %v857
    %v859 = vmul.f32 %v650, 1.442695
    %v860 = vpow.pop %v859
    %v861 = vmul.f32 %v651, 1.442695
    %v862 = vpow.pop %v861
    %v863 = vmul.f32 %v652, 1.442695
    %v864 = vpow.pop %v863
    %v865 = vmul.f32 %v653, 1.442695
    %v866 = vpow.pop %v865
    %v867 = vmul.f32 %v654, 1.442695
    %v868 = vpow.pop %v867
    %v869 = vmul.f32 %v655, 1.442695
    %v870 = vpow.pop %v869
    %v871 = vmul.f32 %v656, 1.442695
    %v872 = vpow.pop %v871
    %v873 = vmul.f32 %v657, 1.442695
    %v874 = vpow.pop %v873
    %v875 = vmul.f32 %v658, 1.442695
    %v876 = vpow.pop %v875
    %v877 = vmul.f32 %v659, 1.442695
    %v878 = vpow.pop %v877
    %v879 = vmul.f32 %v660, 1.442695
    %v880 = vpow.pop %v879
    %v881 = vmul.f32 %v661, 1.442695
    %v882 = vpow.pop %v881
    %v883 = vmul.f32 %v662, 1.442695
    %v884 = vpow.pop %v883
    %v885 = vmul.f32 %v663, 1.442695
    %v886 = vpow.pop %v885
    %v887 = vmul.f32 %v664, 1.442695
    %v888 = vpow.pop %v887
    %v889 = vmul.f32 %v665, 1.442695
    %v890 = vpow.pop %v889
    %v891 = vmul.f32 %v666, 1.442695
    %v892 = vpow.pop %v891
    %v893 = vmul.f32 %v667, 1.442695
    %v894 = vpow.pop %v893
    %v895 = vmul.f32 %v668, 1.442695
    %v896 = vpow.pop %v895
    %v897 = vmul.f32 %v669, 1.442695
    %v898 = vpow.pop %v897
    %v899 = vmul.f32 %v670, 1.442695
    %v900 = vpow.pop %v899
    %v901 = vmul.f32 %v671, 1.442695
    %v902 = vpow.pop %v901
    %v903 = vmul.f32 %v672, 1.442695
    %v904 = vpow.pop %v903
    %v905 = vmul.f32 %v673, 1.442695
    %v906 = vpow.pop %v905
    %v907 = vmul.f32 %v674, 1.442695
    %v908 = vpow.pop %v907
    %v909 = vmul.f32 %v675, 1.442695
    %v910 = vpow.pop %v909
    %v911 = vmul.f32 %v676, 1.442695
    %v912 = vpow.pop %v911
    %v913 = vmul.f32 %v677, 1.442695
    %v914 = vpow.pop %v913
    %v915 = vmul.f32 %v678, 1.442695
    %v916 = vpow.pop %v915
    %v917 = vmul.f32 %v679, 1.442695
    %v918 = vpow.pop %v917
    %v919 = vmul.f32 %v680, 1.442695
    %v920 = vpow.pop %v919
    %v921 = vmul.f32 %v681, 1.442695
    %v922 = vpow.pop %v921
    %v923 = vmul.f32 %v682, 1.442695
    %v924 = vpow.pop %v923
    %v925 = vmul.f32 %v683, 1.442695
    %v926 = vpow.pop %v925
    %v927 = vmul.f32 %v684, 1.442695
    %v928 = vpow.pop %v927
    %v929 = vmul.f32 %v685, 1.442695
    %v930 = vpow.pop %v929
    %v931 = vmul.f32 %v686, 1.442695
    %v932 = vpow.pop %v931
    %v933 = vmul.f32 %v687, 1.442695
    %v934 = vpow.pop %v933
    %v935 = vmul.f32 %v688, 1.442695
    %v936 = vpow.pop %v935
    %v937 = vmul.f32 %v689, 1.442695
    %v938 = vpow.pop %v937
    %v939 = vmul.f32 %v690, 1.442695
    %v940 = vpow.pop %v939
    %v941 = vmul.f32 %v691, 1.442695
    %v942 = vpow.pop %v941
    %v943 = vmul.f32 %v692, 1.442695
    %v944 = vpow.pop %v943
    %v945 = vmul.f32 %v693, 1.442695
    %v946 = vpow.pop %v945
    %v947 = vmul.f32 %v694, 1.442695
    %v948 = vpow.pop %v947
    %v949 = vmul.f32 %v695, 1.442695
    %v950 = vpow.pop %v949
    %v951 = vmul.f32 %v696, 1.442695
    %v952 = vpow.pop %v951
    %v953 = vadd.f32 %v698, %v313
    %v954 = vadd.f32 %v700, %v314
    %v955 = vadd.f32 %v702, %v315
    %v956 = vadd.f32 %v704, %v316
    %v957 = vadd.f32 %v706, %v317
    %v958 = vadd.f32 %v708, %v318
    %v959 = vadd.f32 %v710, %v319
    %v960 = vadd.f32 %v712, %v320
    %v961 = vadd.f32 %v714, %v321
    %v962 = vadd.f32 %v716, %v322
    %v963 = vadd.f32 %v718, %v323
    %v964 = vadd.f32 %v720, %v324
    %v965 = vadd.f32 %v722, %v325
    %v966 = vadd.f32 %v724, %v326
    %v967 = vadd.f32 %v726, %v327
    %v968 = vadd.f32 %v728, %v328
    %v969 = vadd.f32 %v730, %v329
    %v970 = vadd.f32 %v732, %v330
    %v971 = vadd.f32 %v734, %v331
    %v972 = vadd.f32 %v736, %v332
    %v973 = vadd.f32 %v738, %v333
    %v974 = vadd.f32 %v740, %v334
    %v975 = vadd.f32 %v742, %v335
    %v976 = vadd.f32 %v744, %v336
    %v977 = vadd.f32 %v746, %v337
    %v978 = vadd.f32 %v748, %v338
    %v979 = vadd.f32 %v750, %v339
    %v980 = vadd.f32 %v752, %v340
    %v981 = vadd.f32 %v754, %v341
    %v982 = vadd.f32 %v756, %v342
    %v983 = vadd.f32 %v758, %v343
    %v984 = vadd.f32 %v760, %v344
    %v985 = vadd.f32 %v762, %v345
    %v986 = vadd.f32 %v764, %v346
    %v987 = vadd.f32 %v766, %v347
    %v988 = vadd.f32 %v768, %v348
    %v989 = vadd.f32 %v770, %v349
    %v990 = vadd.f32 %v772, %v350
    %v991 = vadd.f32 %v774, %v351
    %v992 = vadd.f32 %v776, %v352
    %v993 = vadd.f32 %v778, %v353
    %v994 = vadd.f32 %v780, %v354
    %v995 = vadd.f32 %v782, %v355
    %v996 = vadd.f32 %v784, %v356
    %v997 = vadd.f32 %v786, %v357
    %v998 = vadd.f32 %v788, %v358
    %v999 = vadd.f32 %v790, %v359
    %v1000 = vadd.f32 %v792, %v360
    %v1001 = vadd.f32 %v794, %v361
    %v1002 = vadd.f32 %v796, %v362
    %v1003 = vadd.f32 %v798, %v363
    %v1004 = vadd.f32 %v800, %v364
    %v1005 = vadd.f32 %v802, %v365
    %v1006 = vadd.f32 %v804, %v366
    %v1007 = vadd.f32 %v806, %v367
    %v1008 = vadd.f32 %v808, %v368
    %v1009 = vadd.f32 %v810, %v369
    %v1010 = vadd.f32 %v812, %v370
    %v1011 = vadd.f32 %v814, %v371
    %v1012 = vadd.f32 %v816, %v372
    %v1013 = vadd.f32 %v818, %v373
    %v1014 = vadd.f32 %v820, %v374
    %v1015 = vadd.f32 %v822, %v375
    %v1016 = vadd.f32 %v824, %v376
    %v1017 = vadd.f32 %v826, %v377
    %v1018 = vadd.f32 %v828, %v378
    %v1019 = vadd.f32 %v830, %v379
    %v1020 = vadd.f32 %v832, %v380
    %v1021 = vadd.f32 %v834, %v381
    %v1022 = vadd.f32 %v836, %v382
    %v1023 = vadd.f32 %v838, %v383
    %v1024 = vadd.f32 %v840, %v384
    %v1025 = vadd.f32 %v842, %v385
    %v1026 = vadd.f32 %v844, %v386
    %v1027 = vadd.f32 %v846, %v387
    %v1028 = vadd.f32 %v848, %v388
    %v1029 = vadd.f32 %v850, %v389
    %v1030 = vadd.f32 %v852, %v390
    %v1031 = vadd.f32 %v854, %v391
    %v1032 = vadd.f32 %v856, %v392
    %v1033 = vadd.f32 %v858, %v393
    %v1034 = vadd.f32 %v860, %v394
    %v1035 = vadd.f32 %v862, %v395
    %v1036 = vadd.f32 %v864, %v396
    %v1037 = vadd.f32 %v866, %v397
    %v1038 = vadd.f32 %v868, %v398
    %v1039 = vadd.f32 %v870, %v399
    %v1040 = vadd.f32 %v872, %v400
    %v1041 = vadd.f32 %v874, %v401
    %v1042 = vadd.f32 %v876, %v402
    %v1043 = vadd.f32 %v878, %v403
    %v1044 = vadd.f32 %v880, %v404
    %v1045 = vadd.f32 %v882, %v405
    %v1046 = vadd.f32 %v884, %v406
    %v1047 = vadd.f32 %v886, %v407
    %v1048 = vadd.f32 %v888, %v408
    %v1049 = vadd.f32 %v890, %v409
    %v1050 = vadd.f32 %v892, %v410
    %v1051 = vadd.f32 %v894, %v411
    %v1052 = vadd.f32 %v896, %v412
    %v1053 = vadd.f32 %v898, %v413
    %v1054 = vadd.f32 %v900, %v414
    %v1055 = vadd.f32 %v902, %v415
    %v1056 = vadd.f32 %v904, %v416
    %v1057 = vadd.f32 %v906, %v417
    %v1058 = vadd.f32 %v908, %v418
    %v1059 = vadd.f32 %v910, %v419
    %v1060 = vadd.f32 %v912, %v420
    %v1061 = vadd.f32 %v914, %v421
    %v1062 = vadd.f32 %v916, %v422
    %v1063 = vadd.f32 %v918, %v423
    %v1064 = vadd.f32 %v920, %v424
    %v1065 = vadd.f32 %v922, %v425
    %v1066 = vadd.f32 %v924, %v426
    %v1067 = vadd.f32 %v926, %v427
    %v1068 = vadd.f32 %v928, %v428
    %v1069 = vadd.f32 %v930, %v429
    %v1070 = vadd.f32 %v932, %v430
    %v1071 = vadd.f32 %v934, %v431
    %v1072 = vadd.f32 %v936, %v432
    %v1073 = vadd.f32 %v938, %v433
    %v1074 = vadd.f32 %v940, %v434
    %v1075 = vadd.f32 %v942, %v435
    %v1076 = vadd.f32 %v944, %v436
    %v1077 = vadd.f32 %v946, %v437
    %v1078 = vadd.f32 %v948, %v438
    %v1079 = vadd.f32 %v950, %v439
    %v1080 = vadd.f32 %v952, %v440
    %v1081 = vmul.f32 %v953, 50.0
    %v1082 = vmul.f32 %v954, 50.0
    %v1083 = vmul.f32 %v955, 50.0
    %v1084 = vmul.f32 %v956, 50.0
    %v1085 = vmul.f32 %v957, 50.0
    %v1086 = vmul.f32 %v958, 50.0
    %v1087 = vmul.f32 %v959, 50.0
    %v1088 = vmul.f32 %v960, 50.0
    %v1089 = vmul.f32 %v961, 50.0
    %v1090 = vmul.f32 %v962, 50.0
    %v1091 = vmul.f32 %v963, 50.0
    %v1092 = vmul.f32 %v964, 50.0
    %v1093 = vmul.f32 %v965, 50.0
    %v1094 = vmul.f32 %v966, 50.0
    %v1095 = vmul.f32 %v967, 50.0
    %v1096 = vmul.f32 %v968, 50.0
    %v1097 = vmul.f32 %v969, 50.0
    %v1098 = vmul.f32 %v970, 50.0
    %v1099 = vmul.f32 %v971, 50.0
    %v1100 = vmul.f32 %v972, 50.0
    %v1101 = vmul.f32 %v973, 50.0
    %v1102 = vmul.f32 %v974, 50.0
    %v1103 = vmul.f32 %v975, 50.0
    %v1104 = vmul.f32 %v976, 50.0
    %v1105 = vmul.f32 %v977, 50.0
    %v1106 = vmul.f32 %v978, 50.0
    %v1107 = vmul.f32 %v979, 50.0
    %v1108 = vmul.f32 %v980, 50.0
    %v1109 = vmul.f32 %v981, 50.0
    %v1110 = vmul.f32 %v982, 50.0
    %v1111 = vmul.f32 %v983, 50.0
    %v1112 = vmul.f32 %v984, 50.0
    %v1113 = vmul.f32 %v985, 50.0
    %v1114 = vmul.f32 %v986, 50.0
    %v1115 = vmul.f32 %v987, 50.0
    %v1116 = vmul.f32 %v988, 50.0
    %v1117 = vmul.f32 %v989, 50.0
    %v1118 = vmul.f32 %v990, 50.0
    %v1119 = vmul.f32 %v991, 50.0
    %v1120 = vmul.f32 %v992, 50.0
    %v1121 = vmul.f32 %v993, 50.0
    %v1122 = vmul.f32 %v994, 50.0
    %v1123 = vmul.f32 %v995, 50.0
    %v1124 = vmul.f32 %v996, 50.0
    %v1125 = vmul.f32 %v997, 50.0
    %v1126 = vmul.f32 %v998, 50.0
    %v1127 = vmul.f32 %v999, 50.0
    %v1128 = vmul.f32 %v1000, 50.0
    %v1129 = vmul.f32 %v1001, 50.0
    %v1130 = vmul.f32 %v1002, 50.0
    %v1131 = vmul.f32 %v1003, 50.0
    %v1132 = vmul.f32 %v1004, 50.0
    %v1133 = vmul.f32 %v1005, 50.0
    %v1134 = vmul.f32 %v1006, 50.0
    %v1135 = vmul.f32 %v1007, 50.0
    %v1136 = vmul.f32 %v1008, 50.0
    %v1137 = vmul.f32 %v1009, 50.0
    %v1138 = vmul.f32 %v1010, 50.0
    %v1139 = vmul.f32 %v1011, 50.0
    %v1140 = vmul.f32 %v1012, 50.0
    %v1141 = vmul.f32 %v1013, 50.0
    %v1142 = vmul.f32 %v1014, 50.0
    %v1143 = vmul.f32 %v1015, 50.0
    %v1144 = vmul.f32 %v1016, 50.0
    %v1145 = vmul.f32 %v1017, 50.0
    %v1146 = vmul.f32 %v1018, 50.0
    %v1147 = vmul.f32 %v1019, 50.0
    %v1148 = vmul.f32 %v1020, 50.0
    %v1149 = vmul.f32 %v1021, 50.0
    %v1150 = vmul.f32 %v1022, 50.0
    %v1151 = vmul.f32 %v1023, 50.0
    %v1152 = vmul.f32 %v1024, 50.0
    %v1153 = vmul.f32 %v1025, 50.0
    %v1154 = vmul.f32 %v1026, 50.0
    %v1155 = vmul.f32 %v1027, 50.0
    %v1156 = vmul.f32 %v1028, 50.0
    %v1157 = vmul.f32 %v1029, 50.0
    %v1158 = vmul.f32 %v1030, 50.0
    %v1159 = vmul.f32 %v1031, 50.0
    %v1160 = vmul.f32 %v1032, 50.0
    %v1161 = vmul.f32 %v1033, 50.0
    %v1162 = vmul.f32 %v1034, 50.0
    %v1163 = vmul.f32 %v1035, 50.0
    %v1164 = vmul.f32 %v1036, 50.0
    %v1165 = vmul.f32 %v1037, 50.0
    %v1166 = vmul.f32 %v1038, 50.0
    %v1167 = vmul.f32 %v1039, 50.0
    %v1168 = vmul.f32 %v1040, 50.0
    %v1169 = vmul.f32 %v1041, 50.0
    %v1170 = vmul.f32 %v1042, 50.0
    %v1171 = vmul.f32 %v1043, 50.0
    %v1172 = vmul.f32 %v1044, 50.0
    %v1173 = vmul.f32 %v1045, 50.0
    %v1174 = vmul.f32 %v1046, 50.0
    %v1175 = vmul.f32 %v1047, 50.0
    %v1176 = vmul.f32 %v1048, 50.0
    %v1177 = vmul.f32 %v1049, 50.0
    %v1178 = vmul.f32 %v1050, 50.0
    %v1179 = vmul.f32 %v1051, 50.0
    %v1180 = vmul.f32 %v1052, 50.0
    %v1181 = vmul.f32 %v1053, 50.0
    %v1182 = vmul.f32 %v1054, 50.0
    %v1183 = vmul.f32 %v1055, 50.0
    %v1184 = vmul.f32 %v1056, 50.0
    %v1185 = vmul.f32 %v1057, 50.0
    %v1186 = vmul.f32 %v1058, 50.0
    %v1187 = vmul.f32 %v1059, 50.0
    %v1188 = vmul.f32 %v1060, 50.0
    %v1189 = vmul.f32 %v1061, 50.0
    %v1190 = vmul.f32 %v1062, 50.0
    %v1191 = vmul.f32 %v1063, 50.0
    %v1192 = vmul.f32 %v1064, 50.0
    %v1193 = vmul.f32 %v1065, 50.0
    %v1194 = vmul.f32 %v1066, 50.0
    %v1195 = vmul.f32 %v1067, 50.0
    %v1196 = vmul.f32 %v1068, 50.0
    %v1197 = vmul.f32 %v1069, 50.0
    %v1198 = vmul.f32 %v1070, 50.0
    %v1199 = vmul.f32 %v1071, 50.0
    %v1200 = vmul.f32 %v1072, 50.0
    %v1201 = vmul.f32 %v1073, 50.0
    %v1202 = vmul.f32 %v1074, 50.0
    %v1203 = vmul.f32 %v1075, 50.0
    %v1204 = vmul.f32 %v1076, 50.0
    %v1205 = vmul.f32 %v1077, 50.0
    %v1206 = vmul.f32 %v1078, 50.0
    %v1207 = vmul.f32 %v1079, 50.0
    %v1208 = vmul.f32 %v1080, 50.0
    %v1209 = vadd.f32 %v441, %v1081
    %v1210 = vadd.f32 %v442, %v1082
    %v1211 = vadd.f32 %v443, %v1083
    %v1212 = vadd.f32 %v444, %v1084
    %v1213 = vadd.f32 %v445, %v1085
    %v1214 = vadd.f32 %v446, %v1086
    %v1215 = vadd.f32 %v447, %v1087
    %v1216 = vadd.f32 %v448, %v1088
    %v1217 = vadd.f32 %v449, %v1089
    %v1218 = vadd.f32 %v450, %v1090
    %v1219 = vadd.f32 %v451, %v1091
    %v1220 = vadd.f32 %v452, %v1092
    %v1221 = vadd.f32 %v453, %v1093
    %v1222 = vadd.f32 %v454, %v1094
    %v1223 = vadd.f32 %v455, %v1095
    %v1224 = vadd.f32 %v456, %v1096
    %v1225 = vadd.f32 %v457, %v1097
    %v1226 = vadd.f32 %v458, %v1098
    %v1227 = vadd.f32 %v459, %v1099
    %v1228 = vadd.f32 %v460, %v1100
    %v1229 = vadd.f32 %v461, %v1101
    %v1230 = vadd.f32 %v462, %v1102
    %v1231 = vadd.f32 %v463, %v1103
    %v1232 = vadd.f32 %v464, %v1104
    %v1233 = vadd.f32 %v465, %v1105
    %v1234 = vadd.f32 %v466, %v1106
    %v1235 = vadd.f32 %v467, %v1107
    %v1236 = vadd.f32 %v468, %v1108
    %v1237 = vadd.f32 %v469, %v1109
    %v1238 = vadd.f32 %v470, %v1110
    %v1239 = vadd.f32 %v471, %v1111
    %v1240 = vadd.f32 %v472, %v1112
    %v1241 = vadd.f32 %v473, %v1113
    %v1242 = vadd.f32 %v474, %v1114
    %v1243 = vadd.f32 %v475, %v1115
    %v1244 = vadd.f32 %v476, %v1116
    %v1245 = vadd.f32 %v477, %v1117
    %v1246 = vadd.f32 %v478, %v1118
    %v1247 = vadd.f32 %v479, %v1119
    %v1248 = vadd.f32 %v480, %v1120
    %v1249 = vadd.f32 %v481, %v1121
    %v1250 = vadd.f32 %v482, %v1122
    %v1251 = vadd.f32 %v483, %v1123
    %v1252 = vadd.f32 %v484, %v1124
    %v1253 = vadd.f32 %v485, %v1125
    %v1254 = vadd.f32 %v486, %v1126
    %v1255 = vadd.f32 %v487, %v1127
    %v1256 = vadd.f32 %v488, %v1128
    %v1257 = vadd.f32 %v489, %v1129
    %v1258 = vadd.f32 %v490, %v1130
    %v1259 = vadd.f32 %v491, %v1131
    %v1260 = vadd.f32 %v492, %v1132
    %v1261 = vadd.f32 %v493, %v1133
    %v1262 = vadd.f32 %v494, %v1134
    %v1263 = vadd.f32 %v495, %v1135
    %v1264 = vadd.f32 %v496, %v1136
    %v1265 = vadd.f32 %v497, %v1137
    %v1266 = vadd.f32 %v498, %v1138
    %v1267 = vadd.f32 %v499, %v1139
    %v1268 = vadd.f32 %v500, %v1140
    %v1269 = vadd.f32 %v501, %v1141
    %v1270 = vadd.f32 %v502, %v1142
    %v1271 = vadd.f32 %v503, %v1143
    %v1272 = vadd.f32 %v504, %v1144
    %v1273 = vadd.f32 %v505, %v1145
    %v1274 = vadd.f32 %v506, %v1146
    %v1275 = vadd.f32 %v507, %v1147
    %v1276 = vadd.f32 %v508, %v1148
    %v1277 = vadd.f32 %v509, %v1149
    %v1278 = vadd.f32 %v510, %v1150
    %v1279 = vadd.f32 %v511, %v1151
    %v1280 = vadd.f32 %v512, %v1152
    %v1281 = vadd.f32 %v513, %v1153
    %v1282 = vadd.f32 %v514, %v1154
    %v1283 = vadd.f32 %v515, %v1155
    %v1284 = vadd.f32 %v516, %v1156
    %v1285 = vadd.f32 %v517, %v1157
    %v1286 = vadd.f32 %v518, %v1158
    %v1287 = vadd.f32 %v519, %v1159
    %v1288 = vadd.f32 %v520, %v1160
    %v1289 = vadd.f32 %v521, %v1161
    %v1290 = vadd.f32 %v522, %v1162
    %v1291 = vadd.f32 %v523, %v1163
    %v1292 = vadd.f32 %v524, %v1164
    %v1293 = vadd.f32 %v525, %v1165
    %v1294 = vadd.f32 %v526, %v1166
    %v1295 = vadd.f32 %v527, %v1167
    %v1296 = vadd.f32 %v528, %v1168
    %v1297 = vadd.f32 %v529, %v1169
    %v1298 = vadd.f32 %v530, %v1170
    %v1299 = vadd.f32 %v531, %v1171
    %v1300 = vadd.f32 %v532, %v1172
    %v1301 = vadd.f32 %v533, %v1173
    %v1302 = vadd.f32 %v534, %v1174
    %v1303 = vadd.f32 %v535, %v1175
    %v1304 = vadd.f32 %v536, %v1176
    %v1305 = vadd.f32 %v537, %v1177
    %v1306 = vadd.f32 %v538, %v1178
    %v1307 = vadd.f32 %v539, %v1179
    %v1308 = vadd.f32 %v540, %v1180
    %v1309 = vadd.f32 %v541, %v1181
    %v1310 = vadd.f32 %v542, %v1182
    %v1311 = vadd.f32 %v543, %v1183
    %v1312 = vadd.f32 %v544, %v1184
    %v1313 = vadd.f32 %v545, %v1185
    %v1314 = vadd.f32 %v546, %v1186
    %v1315 = vadd.f32 %v547, %v1187
    %v1316 = vadd.f32 %v548, %v1188
    %v1317 = vadd.f32 %v549, %v1189
    %v1318 = vadd.f32 %v550, %v1190
    %v1319 = vadd.f32 %v551, %v1191
    %v1320 = vadd.f32 %v552, %v1192
    %v1321 = vadd.f32 %v553, %v1193
    %v1322 = vadd.f32 %v554, %v1194
    %v1323 = vadd.f32 %v555, %v1195
    %v1324 = vadd.f32 %v556, %v1196
    %v1325 = vadd.f32 %v557, %v1197
    %v1326 = vadd.f32 %v558, %v1198
    %v1327 = vadd.f32 %v559, %v1199
    %v1328 = vadd.f32 %v560, %v1200
    %v1329 = vadd.f32 %v561, %v1201
    %v1330 = vadd.f32 %v562, %v1202
    %v1331 = vadd.f32 %v563, %v1203
    %v1332 = vadd.f32 %v564, %v1204
    %v1333 = vadd.f32 %v565, %v1205
    %v1334 = vadd.f32 %v566, %v1206
    %v1335 = vadd.f32 %v567, %v1207
    %v1336 = vadd.f32 %v568, %v1208
    %v1337 = vld [vmem:[#allocation7] sm:$0xff]
    %v1338 = vadd.f32 %v1209, %v1210
    %v1339 = vadd.f32 %v1338, %v1211
    %v1340 = vadd.f32 %v1339, %v1212
    %v1341 = vadd.f32 %v1340, %v1213
    %v1342 = vadd.f32 %v1341, %v1214
    %v1343 = vadd.f32 %v1342, %v1215
    %v1344 = vadd.f32 %v1343, %v1216
    %v1345 = vadd.f32 %v1344, %v1217
    %v1346 = vadd.f32 %v1345, %v1218
    %v1347 = vadd.f32 %v1346, %v1219
    %v1348 = vadd.f32 %v1347, %v1220
    %v1349 = vadd.f32 %v1348, %v1221
    %v1350 = vadd.f32 %v1349, %v1222
    %v1351 = vadd.f32 %v1350, %v1223
    %v1352 = vadd.f32 %v1351, %v1224
    %v1353 = vadd.f32 %v1352, %v1225
    %v1354 = vadd.f32 %v1353, %v1226
    %v1355 = vadd.f32 %v1354, %v1227
    %v1356 = vadd.f32 %v1355, %v1228
    %v1357 = vadd.f32 %v1356, %v1229
    %v1358 = vadd.f32 %v1357, %v1230
    %v1359 = vadd.f32 %v1358, %v1231
    %v1360 = vadd.f32 %v1359, %v1232
    %v1361 = vadd.f32 %v1360, %v1233
    %v1362 = vadd.f32 %v1361, %v1234
    %v1363 = vadd.f32 %v1362, %v1235
    %v1364 = vadd.f32 %v1363, %v1236
    %v1365 = vadd.f32 %v1364, %v1237
    %v1366 = vadd.f32 %v1365, %v1238
    %v1367 = vadd.f32 %v1366, %v1239
    %v1368 = vadd.f32 %v1367, %v1240
    %v1369 = vadd.f32 %v1368, %v1241
    %v1370 = vadd.f32 %v1369, %v1242
    %v1371 = vadd.f32 %v1370, %v1243
    %v1372 = vadd.f32 %v1371, %v1244
    %v1373 = vadd.f32 %v1372, %v1245
    %v1374 = vadd.f32 %v1373, %v1246
    %v1375 = vadd.f32 %v1374, %v1247
    %v1376 = vadd.f32 %v1375, %v1248
    %v1377 = vadd.f32 %v1376, %v1249
    %v1378 = vadd.f32 %v1377, %v1250
    %v1379 = vadd.f32 %v1378, %v1251
    %v1380 = vadd.f32 %v1379, %v1252
    %v1381 = vadd.f32 %v1380, %v1253
    %v1382 = vadd.f32 %v1381, %v1254
    %v1383 = vadd.f32 %v1382, %v1255
    %v1384 = vadd.f32 %v1383, %v1256
    %v1385 = vadd.f32 %v1384, %v1257
    %v1386 = vadd.f32 %v1385, %v1258
    %v1387 = vadd.f32 %v1386, %v1259
    %v1388 = vadd.f32 %v1387, %v1260
    %v1389 = vadd.f32 %v1388, %v1261
    %v1390 = vadd.f32 %v1389, %v1262
    %v1391 = vadd.f32 %v1390, %v1263
    %v1392 = vadd.f32 %v1391, %v1264
    %v1393 = vadd.f32 %v1392, %v1265
    %v1394 = vadd.f32 %v1393, %v1266
    %v1395 = vadd.f32 %v1394, %v1267
    %v1396 = vadd.f32 %v1395, %v1268
    %v1397 = vadd.f32 %v1396, %v1269
    %v1398 = vadd.f32 %v1397, %v1270
    %v1399 = vadd.f32 %v1398, %v1271
    %v1400 = vadd.f32 %v1399, %v1272
    %v1401 = vadd.f32 %v1400, %v1273
    %v1402 = vadd.f32 %v1401, %v1274
    %v1403 = vadd.f32 %v1402, %v1275
    %v1404 = vadd.f32 %v1403, %v1276
    %v1405 = vadd.f32 %v1404, %v1277
    %v1406 = vadd.f32 %v1405, %v1278
    %v1407 = vadd.f32 %v1406, %v1279
    %v1408 = vadd.f32 %v1407, %v1280
    %v1409 = vadd.f32 %v1408, %v1281
    %v1410 = vadd.f32 %v1409, %v1282
    %v1411 = vadd.f32 %v1410, %v1283
    %v1412 = vadd.f32 %v1411, %v1284
    %v1413 = vadd.f32 %v1412, %v1285
    %v1414 = vadd.f32 %v1413, %v1286
    %v1415 = vadd.f32 %v1414, %v1287
    %v1416 = vadd.f32 %v1415, %v1288
    %v1417 = vadd.f32 %v1416, %v1289
    %v1418 = vadd.f32 %v1417, %v1290
    %v1419 = vadd.f32 %v1418, %v1291
    %v1420 = vadd.f32 %v1419, %v1292
    %v1421 = vadd.f32 %v1420, %v1293
    %v1422 = vadd.f32 %v1421, %v1294
    %v1423 = vadd.f32 %v1422, %v1295
    %v1424 = vadd.f32 %v1423, %v1296
    %v1425 = vadd.f32 %v1424, %v1297
    %v1426 = vadd.f32 %v1425, %v1298
    %v1427 = vadd.f32 %v1426, %v1299
    %v1428 = vadd.f32 %v1427, %v1300
    %v1429 = vadd.f32 %v1428, %v1301
    %v1430 = vadd.f32 %v1429, %v1302
    %v1431 = vadd.f32 %v1430, %v1303
    %v1432 = vadd.f32 %v1431, %v1304
    %v1433 = vadd.f32 %v1432, %v1305
    %v1434 = vadd.f32 %v1433, %v1306
    %v1435 = vadd.f32 %v1434, %v1307
    %v1436 = vadd.f32 %v1435, %v1308
    %v1437 = vadd.f32 %v1436, %v1309
    %v1438 = vadd.f32 %v1437, %v1310
    %v1439 = vadd.f32 %v1438, %v1311
    %v1440 = vadd.f32 %v1439, %v1312
    %v1441 = vadd.f32 %v1440, %v1313
    %v1442 = vadd.f32 %v1441, %v1314
    %v1443 = vadd.f32 %v1442, %v1315
    %v1444 = vadd.f32 %v1443, %v1316
    %v1445 = vadd.f32 %v1444, %v1317
    %v1446 = vadd.f32 %v1445, %v1318
    %v1447 = vadd.f32 %v1446, %v1319
    %v1448 = vadd.f32 %v1447, %v1320
    %v1449 = vadd.f32 %v1448, %v1321
    %v1450 = vadd.f32 %v1449, %v1322
    %v1451 = vadd.f32 %v1450, %v1323
    %v1452 = vadd.f32 %v1451, %v1324
    %v1453 = vadd.f32 %v1452, %v1325
    %v1454 = vadd.f32 %v1453, %v1326
    %v1455 = vadd.f32 %v1454, %v1327
    %v1456 = vadd.f32 %v1455, %v1328
    %v1457 = vadd.f32 %v1456, %v1329
    %v1458 = vadd.f32 %v1457, %v1330
    %v1459 = vadd.f32 %v1458, %v1331
    %v1460 = vadd.f32 %v1459, %v1332
    %v1461 = vadd.f32 %v1460, %v1333
    %v1462 = vadd.f32 %v1461, %v1334
    %v1463 = vadd.f32 %v1462, %v1335
    %v1464 = vadd.f32 %v1463, %v1336
    %v1465 = vadd.f32 %v1337, %v1464
    %1466 = vst [vmem:[#allocation7] sm:$0xff] %v1465
    // Predicated region
    $region22: #{tpu_custom_call.1} parent=1 // pred_check
      _
    $region23: #{tpu_custom_call.1} parent=1 // pred_check_branch
      %1468 = sbr.rel (0) target = $region25
    $region24: #{tpu_custom_call.1} parent=1 // pred_region
      %s1470 = ssub.s32 128, 128
      %1471 = vsyncadd [#allocation4], %s1470
      %s1473 = sshll.u32 [#allocation7], 4
      %s1474 = int_to_ptr.vmem [resolvable:$true] %s1473
      %1476 = dma.vmem_to_hbm [thread:$0]  %s1474, 128, %s2, [#allocation4]
    $region25: #{tpu_custom_call.1} parent=1 // pred_fallthru
      _
    // Predicated region
    $region26: #{tpu_custom_call.1} parent=1 // pred_check
      _
    $region27: #{tpu_custom_call.1} parent=1 // pred_check_branch
      %1478 = sbr.rel (0) target = $region29
    $region28: #{tpu_custom_call.1} parent=1 // pred_region
      %1479 = dma.done [#allocation4], 128
    $region29: #{tpu_custom_call.1} parent=1 // pred_fallthru
      _
    %1480 = vsyncpa [#allocation3], 1
    %1481 = vsyncpa [#allocation6], 1
    %1482 = vsyncpa [#allocation4], 1

</llo_original>
